<compile_context>
chip_gen: v6e
topology: v6e:2x2x1
jax: 0.10.0
libtpu: 0.0.40
codegen_flags: <defaults>
</compile_context>

<pallas_src>
import math

import jax
import jax.numpy as jnp
from jax.experimental import pallas as pl
from jax.experimental.pallas import tpu as pltpu

# Model config (ModelConfig equivalents)
D_MODEL = 32
NUM_HEADS = 4
D_Q_K = 8
D_V = 8
DROPOUT = 0.1  # eval-mode no-op


# ---------------------------------------------------------------------------
# Fused Pallas kernel: projections + attention + output projection
# One grid step == one batch element (grid axis is "parallel").
# ---------------------------------------------------------------------------
def _mha_fused_kernel(q_ref, k_ref, v_ref, mask_ref,
                      wq_ref, wk_ref, wv_ref, wo_ref, bo_ref,
                      out_ref, scores_ref):
    # Per-step block shapes:
    #   q_ref:    (Sq, D_MODEL)  f32        k/v_ref: (Sk, D_MODEL) f32
    #   mask_ref: (1, Sq, Sk)    int8 (1 = keep, 0 = masked)
    #   wq/wk:    (H, D_MODEL, Dk) bf16     wv: (H, D_MODEL, Dv) bf16
    #   wo:       (H, Dv, D_MODEL) bf16     bo: (1, D_MODEL) f32
    #   out_ref:  (Sq, D_MODEL)             scores_ref: (1, H, Sq, Sk) f32
    _, H, Sq, Sk = scores_ref.shape
    D = q_ref.shape[-1]
    Dk = wq_ref.shape[-1]

    inv_sqrt_dk = jnp.float32(1.0 / math.sqrt(Dk))

    # bf16 MXU operands; 1/sqrt(Dk) folded into q once (cheaper than scaling
    # the (H, Sq, Sk) scores). Broadcast over the head axis is done once.
    q_b = jnp.broadcast_to(
        ((q_ref[...] * inv_sqrt_dk).astype(jnp.bfloat16))[None], (H, Sq, D))
    k_b = jnp.broadcast_to(k_ref[...].astype(jnp.bfloat16)[None], (H, Sk, D))
    v_b = jnp.broadcast_to(v_ref[...].astype(jnp.bfloat16)[None], (H, Sk, D))

    # Head-major projections as leading-batch batched matmuls (no lane slices,
    # no in-kernel transposes); fp32 accumulation.
    qh = jnp.einsum("hsd,hdk->hsk", q_b, wq_ref[...],
                    preferred_element_type=jnp.float32)          # (H, Sq, Dk)
    kh = jnp.einsum("hsd,hdk->hsk", k_b, wk_ref[...],
                    preferred_element_type=jnp.float32)          # (H, Sk, Dk)
    vh = jnp.einsum("hsd,hdk->hsk", v_b, wv_ref[...],
                    preferred_element_type=jnp.float32)          # (H, Sk, Dv)

    # Additive mask bias computed ONCE: 0 where keep, -1e9 where masked.
    bias = (mask_ref[...].astype(jnp.float32) - 1.0) * jnp.float32(1e9)  # (1,Sq,Sk)

    # Scores for all heads in one batched contraction (QK^T, no materialized
    # transpose), fp32 accumulation.
    s = jnp.einsum("hqd,hkd->hqk",
                   qh.astype(jnp.bfloat16), kh.astype(jnp.bfloat16),
                   preferred_element_type=jnp.float32)           # (H, Sq, Sk)
    s = s + bias

    # Numerically stable softmax over keys; fp32 on VPU, exp/recip on EUP.
    s = s - jnp.max(s, axis=-1, keepdims=True)
    p = jnp.exp(s)
    p = p * pl.reciprocal(jnp.sum(p, axis=-1, keepdims=True), approx=True)

    # One contiguous store of this batch's attention scores.
    scores_ref[...] = p[None].astype(scores_ref.dtype)

    # TODO(synk): train-mode dropout on p would use pltpu.prng_seed /
    # pltpu.prng_random_bits; nn.Dropout is identity in eval mode.

    # Attention-weighted values for all heads, then fused combine_heads + w_o:
    #   concat_h(o_h) @ w_o == sum_h o_h @ w_o[h]
    # realized as one batched matmul plus a leading-axis sum (no lane concat).
    o = jnp.einsum("hqk,hkd->hqd",
                   p.astype(jnp.bfloat16), vh.astype(jnp.bfloat16),
                   preferred_element_type=jnp.float32)           # (H, Sq, Dv)
    partial = jnp.einsum("hqd,hdm->hqm",
                         o.astype(jnp.bfloat16), wo_ref[...],
                         preferred_element_type=jnp.float32)     # (H, Sq, D)
    out_ref[...] = (jnp.sum(partial, axis=0) + bo_ref[...]).astype(out_ref.dtype)


# ---------------------------------------------------------------------------
# Wrapper
# ---------------------------------------------------------------------------
def multi_head_attention_forward(q, k, v, mask, params):
    """Full forward pass of MultiHeadAttentionBlock in one pallas_call.

    q,k,v: (B, S, D_MODEL); mask: (B, 1, S, S) with 1 = keep, 0 = masked.
    Returns (output (B,S,D_MODEL), attention_scores (B,H,S,S)).
    """
    B, Sq, _ = q.shape
    Sk = k.shape[1]
    H, Dk, Dv = NUM_HEADS, D_Q_K, D_V

    # Lane-dense activations; int8 mask (4x less DMA/VMEM than fp32).
    q2 = q.reshape(B * Sq, D_MODEL)
    k2 = k.reshape(B * Sk, D_MODEL)
    v2 = v.reshape(B * Sk, D_MODEL)
    mask3 = (mask.reshape(B, Sq, Sk) != 0).astype(jnp.int8)

    # Head-major bf16 weights (layout plumbing done once, outside the kernel).
    wq3 = params["w_q"].reshape(D_MODEL, H, Dk).transpose(1, 0, 2).astype(jnp.bfloat16)
    wk3 = params["w_k"].reshape(D_MODEL, H, Dk).transpose(1, 0, 2).astype(jnp.bfloat16)
    wv3 = params["w_v"].reshape(D_MODEL, H, Dv).transpose(1, 0, 2).astype(jnp.bfloat16)
    wo3 = params["w_o"].reshape(H, Dv, D_MODEL).astype(jnp.bfloat16)
    bo = params["b_o"].astype(jnp.float32)

    out2, scores = pl.pallas_call(
        _mha_fused_kernel,
        out_shape=(
            jax.ShapeDtypeStruct((B * Sq, D_MODEL), q.dtype),
            jax.ShapeDtypeStruct((B, H, Sq, Sk), jnp.float32),
        ),
        grid=(B,),  # one batch per step; "parallel" => megacore-shardable (v7x)
        in_specs=[
            pl.BlockSpec((Sq, D_MODEL), lambda b: (b, 0)),        # q rows of batch b
            pl.BlockSpec((Sk, D_MODEL), lambda b: (b, 0)),        # k
            pl.BlockSpec((Sk, D_MODEL), lambda b: (b, 0)),        # v
            pl.BlockSpec((1, Sq, Sk), lambda b: (b, 0, 0)),       # mask (int8)
            pl.BlockSpec((H, D_MODEL, Dk), lambda b: (0, 0, 0)),  # w_q (head-major)
            pl.BlockSpec((H, D_MODEL, Dk), lambda b: (0, 0, 0)),  # w_k
            pl.BlockSpec((H, D_MODEL, Dv), lambda b: (0, 0, 0)),  # w_v
            pl.BlockSpec((H, Dv, D_MODEL), lambda b: (0, 0, 0)),  # w_o
            pl.BlockSpec((1, D_MODEL), lambda b: (0, 0)),         # b_o
        ],
        out_specs=(
            pl.BlockSpec((Sq, D_MODEL), lambda b: (b, 0)),
            pl.BlockSpec((1, H, Sq, Sk), lambda b: (b, 0, 0, 0)),
        ),
        compiler_params=pltpu.CompilerParams(
            dimension_semantics=("parallel",)),
    )(q2, k2, v2, mask3, wq3, wk3, wv3, wo3, bo)

    return out2.reshape(B, Sq, D_MODEL), scores


# ---------------------------------------------------------------------------
# Pure-JAX reference (fp32, for correctness check)
# ---------------------------------------------------------------------------
def reference_forward(q, k, v, mask, params):
    B, Sq, _ = q.shape
    Sk = k.shape[1]
    qp = (q @ params["w_q"]).reshape(B, Sq, NUM_HEADS, D_Q_K).transpose(0, 2, 1, 3)
    kp = (k @ params["w_k"]).reshape(B, Sk, NUM_HEADS, D_Q_K).transpose(0, 2, 1, 3)
    vp = (v @ params["w_v"]).reshape(B, Sk, NUM_HEADS, D_V).transpose(0, 2, 1, 3)
    scores = jnp.einsum("bhqd,bhkd->bhqk", qp, kp) / math.sqrt(D_Q_K)
    scores = jnp.where(mask == 0, -1e9, scores)
    p = jax.nn.softmax(scores, axis=-1)
    o = jnp.einsum("bhqk,bhkd->bhqd", p, vp)
    o = o.transpose(0, 2, 1, 3).reshape(B, Sq, NUM_HEADS * D_V)
    return o @ params["w_o"] + params["b_o"][0], p


# ---------------------------------------------------------------------------
# Main
# ---------------------------------------------------------------------------
if __name__ == "__main__":
    key = jax.random.PRNGKey(0)
    ks = jax.random.split(key, 9)

    B, S = 2, 8

    # Deterministic parameter init (weights stored already transposed: (in, out))
    scale = 0.02
    params = {
        "w_q": scale * jax.random.normal(ks[0], (D_MODEL, NUM_HEADS * D_Q_K), jnp.float32),
        "w_k": scale * jax.random.normal(ks[1], (D_MODEL, NUM_HEADS * D_Q_K), jnp.float32),
        "w_v": scale * jax.random.normal(ks[2], (D_MODEL, NUM_HEADS * D_V), jnp.float32),
        "w_o": scale * jax.random.normal(ks[3], (NUM_HEADS * D_V, D_MODEL), jnp.float32),
        "b_o": scale * jax.random.normal(ks[4], (1, D_MODEL), jnp.float32),
    }

    q = jax.random.normal(ks[5], (B, S, D_MODEL), jnp.float32)
    k = jax.random.normal(ks[6], (B, S, D_MODEL), jnp.float32)
    v = jax.random.normal(ks[7], (B, S, D_MODEL), jnp.float32)

    # Causal mask, shape (B, 1, S, S): 1 = attend, 0 = masked
    causal = jnp.tril(jnp.ones((S, S), jnp.float32))
    mask = jnp.tile(causal[None, None, :, :], (B, 1, 1, 1))

    out, attn_scores = multi_head_attention_forward(q, k, v, mask, params)
    out = jax.block_until_ready(out)
    attn_scores = jax.block_until_ready(attn_scores)

    ref_out, ref_scores = reference_forward(q, k, v, mask, params)
    assert out.shape == (B, S, D_MODEL)
    assert attn_scores.shape == (B, NUM_HEADS, S, S)
    # Tolerance loosened vs. pure-fp32 parity: MXU operands are bf16 and the
    # softmax denominator uses approx reciprocal (per perf review).
    assert jnp.allclose(out, ref_out, atol=1e-2, rtol=1e-2)
    assert jnp.allclose(attn_scores, ref_scores, atol=1e-2, rtol=1e-2)

    print("KERNEL_OK")
</pallas_src>

<mosaic_0001>
module attributes {stable_mosaic.version = 11 : i64} {
  func.func @_mha_fused_kernel(%arg0: i32, %arg1: memref<8x32xf32, #tpu.memory_space<vmem>>, %arg2: memref<8x32xf32, #tpu.memory_space<vmem>>, %arg3: memref<8x32xf32, #tpu.memory_space<vmem>>, %arg4: memref<1x8x8xi8, #tpu.memory_space<vmem>>, %arg5: memref<4x32x8xbf16, #tpu.memory_space<vmem>>, %arg6: memref<4x32x8xbf16, #tpu.memory_space<vmem>>, %arg7: memref<4x32x8xbf16, #tpu.memory_space<vmem>>, %arg8: memref<4x8x32xbf16, #tpu.memory_space<vmem>>, %arg9: memref<1x32xf32, #tpu.memory_space<vmem>>, %arg10: memref<8x32xf32, #tpu.memory_space<vmem>>, %arg11: memref<1x4x8x8xf32, #tpu.memory_space<vmem>>) attributes {dimension_semantics = [#tpu.dimension_semantics<parallel>], iteration_bounds = array<i64: 2>, scalar_prefetch = 0 : i64, scratch_operands = 0 : i64, tpu.core_type = #tpu.core_type<tc>, window_params = [{transform_indices = @transform_0, window_bounds = array<i64: 8, 32>}, {transform_indices = @transform_1, window_bounds = array<i64: 8, 32>}, {transform_indices = @transform_2, window_bounds = array<i64: 8, 32>}, {transform_indices = @transform_3, window_bounds = array<i64: 1, 8, 8>}, {pipeline_mode = #tpu.pipeline_mode<synchronous>, transform_indices = @transform_4, window_bounds = array<i64: 4, 32, 8>}, {pipeline_mode = #tpu.pipeline_mode<synchronous>, transform_indices = @transform_5, window_bounds = array<i64: 4, 32, 8>}, {pipeline_mode = #tpu.pipeline_mode<synchronous>, transform_indices = @transform_6, window_bounds = array<i64: 4, 32, 8>}, {pipeline_mode = #tpu.pipeline_mode<synchronous>, transform_indices = @transform_7, window_bounds = array<i64: 4, 8, 32>}, {pipeline_mode = #tpu.pipeline_mode<synchronous>, transform_indices = @transform_8, window_bounds = array<i64: 1, 32>}, {transform_indices = @transform_9, window_bounds = array<i64: 8, 32>}, {transform_indices = @transform_10, window_bounds = array<i64: 1, 4, 8, 8>}]} {
    %c0 = arith.constant 0 : index
    %c0_0 = arith.constant 0 : index
    %0 = vector.load %arg1[%c0, %c0_0] : memref<8x32xf32, #tpu.memory_space<vmem>>, vector<8x32xf32>
    %cst = arith.constant 0.353553385 : f32
    %1 = vector.broadcast %cst : f32 to vector<8x32xf32>
    %2 = arith.mulf %0, %1 : vector<8x32xf32>
    %3 = arith.truncf %2 : vector<8x32xf32> to vector<8x32xbf16>
    %4 = vector.shape_cast %3 : vector<8x32xbf16> to vector<1x8x32xbf16>
    %5 = vector.shape_cast %4 : vector<1x8x32xbf16> to vector<1x8x32xbf16>
    %6 = vector.broadcast %5 : vector<1x8x32xbf16> to vector<4x8x32xbf16>
    %c0_1 = arith.constant 0 : index
    %c0_2 = arith.constant 0 : index
    %7 = vector.load %arg2[%c0_1, %c0_2] : memref<8x32xf32, #tpu.memory_space<vmem>>, vector<8x32xf32>
    %8 = arith.truncf %7 : vector<8x32xf32> to vector<8x32xbf16>
    %9 = vector.shape_cast %8 : vector<8x32xbf16> to vector<1x8x32xbf16>
    %10 = vector.shape_cast %9 : vector<1x8x32xbf16> to vector<1x8x32xbf16>
    %11 = vector.broadcast %10 : vector<1x8x32xbf16> to vector<4x8x32xbf16>
    %c0_3 = arith.constant 0 : index
    %c0_4 = arith.constant 0 : index
    %12 = vector.load %arg3[%c0_3, %c0_4] : memref<8x32xf32, #tpu.memory_space<vmem>>, vector<8x32xf32>
    %13 = arith.truncf %12 : vector<8x32xf32> to vector<8x32xbf16>
    %14 = vector.shape_cast %13 : vector<8x32xbf16> to vector<1x8x32xbf16>
    %15 = vector.shape_cast %14 : vector<1x8x32xbf16> to vector<1x8x32xbf16>
    %16 = vector.broadcast %15 : vector<1x8x32xbf16> to vector<4x8x32xbf16>
    %c0_5 = arith.constant 0 : index
    %c0_6 = arith.constant 0 : index
    %c0_7 = arith.constant 0 : index
    %17 = vector.load %arg5[%c0_5, %c0_6, %c0_7] : memref<4x32x8xbf16, #tpu.memory_space<vmem>>, vector<4x32x8xbf16>
    "tpu.trace_start"() <{level = 10 : i32, message = "hsd,hdk->hsk"}> : () -> ()
    %cst_8 = arith.constant dense<0.000000e+00> : vector<4x8x8xf32>
    %18 = tpu.matmul %6, %17, %cst_8 {dimension_numbers = #tpu.dot_dimension_numbers<[2], [1], [1], [2], [0, 0, 0, 1, 1, 2], [0], [0]>} : vector<4x8x32xbf16>, vector<4x32x8xbf16>, vector<4x8x8xf32> -> vector<4x8x8xf32>
    "tpu.trace_stop"() : () -> ()
    %c0_9 = arith.constant 0 : index
    %c0_10 = arith.constant 0 : index
    %c0_11 = arith.constant 0 : index
    %19 = vector.load %arg6[%c0_9, %c0_10, %c0_11] : memref<4x32x8xbf16, #tpu.memory_space<vmem>>, vector<4x32x8xbf16>
    "tpu.trace_start"() <{level = 10 : i32, message = "hsd,hdk->hsk"}> : () -> ()
    %cst_12 = arith.constant dense<0.000000e+00> : vector<4x8x8xf32>
    %20 = tpu.matmul %11, %19, %cst_12 {dimension_numbers = #tpu.dot_dimension_numbers<[2], [1], [1], [2], [0, 0, 0, 1, 1, 2], [0], [0]>} : vector<4x8x32xbf16>, vector<4x32x8xbf16>, vector<4x8x8xf32> -> vector<4x8x8xf32>
    "tpu.trace_stop"() : () -> ()
    %c0_13 = arith.constant 0 : index
    %c0_14 = arith.constant 0 : index
    %c0_15 = arith.constant 0 : index
    %21 = vector.load %arg7[%c0_13, %c0_14, %c0_15] : memref<4x32x8xbf16, #tpu.memory_space<vmem>>, vector<4x32x8xbf16>
    "tpu.trace_start"() <{level = 10 : i32, message = "hsd,hdk->hsk"}> : () -> ()
    %cst_16 = arith.constant dense<0.000000e+00> : vector<4x8x8xf32>
    %22 = tpu.matmul %16, %21, %cst_16 {dimension_numbers = #tpu.dot_dimension_numbers<[2], [1], [1], [2], [0, 0, 0, 1, 1, 2], [0], [0]>} : vector<4x8x32xbf16>, vector<4x32x8xbf16>, vector<4x8x8xf32> -> vector<4x8x8xf32>
    "tpu.trace_stop"() : () -> ()
    %c0_17 = arith.constant 0 : index
    %c0_18 = arith.constant 0 : index
    %c0_19 = arith.constant 0 : index
    %23 = vector.load %arg4[%c0_17, %c0_18, %c0_19] : memref<1x8x8xi8, #tpu.memory_space<vmem>>, vector<1x8x8xi8>
    %24 = arith.sitofp %23 : vector<1x8x8xi8> to vector<1x8x8xf32>
    %cst_20 = arith.constant 1.000000e+00 : f32
    %25 = vector.broadcast %cst_20 : f32 to vector<1x8x8xf32>
    %26 = arith.subf %24, %25 : vector<1x8x8xf32>
    %cst_21 = arith.constant 1.000000e+09 : f32
    %27 = vector.broadcast %cst_21 : f32 to vector<1x8x8xf32>
    %28 = arith.mulf %26, %27 : vector<1x8x8xf32>
    %29 = arith.truncf %18 : vector<4x8x8xf32> to vector<4x8x8xbf16>
    %30 = arith.truncf %20 : vector<4x8x8xf32> to vector<4x8x8xbf16>
    "tpu.trace_start"() <{level = 10 : i32, message = "hqd,hkd->hqk"}> : () -> ()
    %cst_22 = arith.constant dense<0.000000e+00> : vector<4x8x8xf32>
    %31 = tpu.matmul %29, %30, %cst_22 {dimension_numbers = #tpu.dot_dimension_numbers<[2], [2], [1], [1], [0, 0, 0, 1, 1, 1], [0], [0]>} : vector<4x8x8xbf16>, vector<4x8x8xbf16>, vector<4x8x8xf32> -> vector<4x8x8xf32>
    "tpu.trace_stop"() : () -> ()
    %32 = vector.broadcast %28 : vector<1x8x8xf32> to vector<4x8x8xf32>
    %33 = arith.addf %31, %32 : vector<4x8x8xf32>
    %cst_23 = arith.constant dense<0xFF800000> : vector<4x8xf32>
    %34 = vector.multi_reduction <maximumf>, %33, %cst_23 [2] : vector<4x8x8xf32> to vector<4x8xf32>
    %35 = vector.shape_cast %34 : vector<4x8xf32> to vector<4x8x1xf32>
    %36 = vector.broadcast %35 : vector<4x8x1xf32> to vector<4x8x8xf32>
    %37 = arith.subf %33, %36 : vector<4x8x8xf32>
    %38 = math.exp %37 : vector<4x8x8xf32>
    %cst_24 = arith.constant dense<0.000000e+00> : vector<4x8xf32>
    %39 = vector.multi_reduction <add>, %38, %cst_24 [2] : vector<4x8x8xf32> to vector<4x8xf32>
    %40 = vector.shape_cast %39 : vector<4x8xf32> to vector<4x8x1xf32>
    %41 = tpu.reciprocal %40 {approx = true} : vector<4x8x1xf32> -> vector<4x8x1xf32>
    %42 = vector.broadcast %41 : vector<4x8x1xf32> to vector<4x8x8xf32>
    %43 = arith.mulf %38, %42 : vector<4x8x8xf32>
    %44 = vector.shape_cast %43 : vector<4x8x8xf32> to vector<1x4x8x8xf32>
    %c0_25 = arith.constant 0 : index
    %c0_26 = arith.constant 0 : index
    %c0_27 = arith.constant 0 : index
    %c0_28 = arith.constant 0 : index
    %45 = vector.load %arg11[%c0_25, %c0_26, %c0_27, %c0_28] : memref<1x4x8x8xf32, #tpu.memory_space<vmem>>, vector<1x4x8x8xf32>
    tpu.vector_store %arg11[%c0_25, %c0_26, %c0_27, %c0_28], %44 {strides = array<i32>} : memref<1x4x8x8xf32, #tpu.memory_space<vmem>>, vector<1x4x8x8xf32>,
    %46 = arith.truncf %43 : vector<4x8x8xf32> to vector<4x8x8xbf16>
    %47 = arith.truncf %22 : vector<4x8x8xf32> to vector<4x8x8xbf16>
    "tpu.trace_start"() <{level = 10 : i32, message = "hqk,hkd->hqd"}> : () -> ()
    %cst_29 = arith.constant dense<0.000000e+00> : vector<4x8x8xf32>
    %48 = tpu.matmul %46, %47, %cst_29 {dimension_numbers = #tpu.dot_dimension_numbers<[2], [1], [1], [2], [0, 0, 0, 1, 1, 2], [0], [0]>} : vector<4x8x8xbf16>, vector<4x8x8xbf16>, vector<4x8x8xf32> -> vector<4x8x8xf32>
    "tpu.trace_stop"() : () -> ()
    %49 = arith.truncf %48 : vector<4x8x8xf32> to vector<4x8x8xbf16>
    %c0_30 = arith.constant 0 : index
    %c0_31 = arith.constant 0 : index
    %c0_32 = arith.constant 0 : index
    %50 = vector.load %arg8[%c0_30, %c0_31, %c0_32] : memref<4x8x32xbf16, #tpu.memory_space<vmem>>, vector<4x8x32xbf16>
    "tpu.trace_start"() <{level = 10 : i32, message = "hqd,hdm->hqm"}> : () -> ()
    %cst_33 = arith.constant dense<0.000000e+00> : vector<4x8x32xf32>
    %51 = tpu.matmul %49, %50, %cst_33 {dimension_numbers = #tpu.dot_dimension_numbers<[2], [1], [1], [2], [0, 0, 0, 1, 1, 2], [0], [0]>} : vector<4x8x8xbf16>, vector<4x8x32xbf16>, vector<4x8x32xf32> -> vector<4x8x32xf32>
    "tpu.trace_stop"() : () -> ()
    %cst_34 = arith.constant dense<0.000000e+00> : vector<8x32xf32>
    %52 = vector.multi_reduction <add>, %51, %cst_34 [0] : vector<4x8x32xf32> to vector<8x32xf32>
    %c0_35 = arith.constant 0 : index
    %c0_36 = arith.constant 0 : index
    %53 = vector.load %arg9[%c0_35, %c0_36] : memref<1x32xf32, #tpu.memory_space<vmem>>, vector<1x32xf32>
    %54 = vector.broadcast %53 : vector<1x32xf32> to vector<8x32xf32>
    %55 = arith.addf %52, %54 : vector<8x32xf32>
    %c0_37 = arith.constant 0 : index
    %c0_38 = arith.constant 0 : index
    %56 = vector.load %arg10[%c0_37, %c0_38] : memref<8x32xf32, #tpu.memory_space<vmem>>, vector<8x32xf32>
    tpu.vector_store %arg10[%c0_37, %c0_38], %55 {strides = array<i32>} : memref<8x32xf32, #tpu.memory_space<vmem>>, vector<8x32xf32>,
    return
  }
  func.func @transform_0(%arg0: i32) -> (i32, i32) {
    %c0_i32 = arith.constant 0 : i32
    %c0_i32_0 = arith.constant 0 : i32
    return %arg0, %c0_i32 : i32, i32
  }
  func.func @transform_1(%arg0: i32) -> (i32, i32) {
    %c0_i32 = arith.constant 0 : i32
    %c0_i32_0 = arith.constant 0 : i32
    return %arg0, %c0_i32 : i32, i32
  }
  func.func @transform_2(%arg0: i32) -> (i32, i32) {
    %c0_i32 = arith.constant 0 : i32
    %c0_i32_0 = arith.constant 0 : i32
    return %arg0, %c0_i32 : i32, i32
  }
  func.func @transform_3(%arg0: i32) -> (i32, i32, i32) {
    %c0_i32 = arith.constant 0 : i32
    %c0_i32_0 = arith.constant 0 : i32
    %c0_i32_1 = arith.constant 0 : i32
    return %arg0, %c0_i32, %c0_i32_0 : i32, i32, i32
  }
  func.func @transform_4(%arg0: i32) -> (i32, i32, i32) {
    %c0_i32 = arith.constant 0 : i32
    %c0_i32_0 = arith.constant 0 : i32
    %c0_i32_1 = arith.constant 0 : i32
    %c0_i32_2 = arith.constant 0 : i32
    return %c0_i32, %c0_i32_0, %c0_i32_1 : i32, i32, i32
  }
  func.func @transform_5(%arg0: i32) -> (i32, i32, i32) {
    %c0_i32 = arith.constant 0 : i32
    %c0_i32_0 = arith.constant 0 : i32
    %c0_i32_1 = arith.constant 0 : i32
    %c0_i32_2 = arith.constant 0 : i32
    return %c0_i32, %c0_i32_0, %c0_i32_1 : i32, i32, i32
  }
  func.func @transform_6(%arg0: i32) -> (i32, i32, i32) {
    %c0_i32 = arith.constant 0 : i32
    %c0_i32_0 = arith.constant 0 : i32
    %c0_i32_1 = arith.constant 0 : i32
    %c0_i32_2 = arith.constant 0 : i32
    return %c0_i32, %c0_i32_0, %c0_i32_1 : i32, i32, i32
  }
  func.func @transform_7(%arg0: i32) -> (i32, i32, i32) {
    %c0_i32 = arith.constant 0 : i32
    %c0_i32_0 = arith.constant 0 : i32
    %c0_i32_1 = arith.constant 0 : i32
    %c0_i32_2 = arith.constant 0 : i32
    return %c0_i32, %c0_i32_0, %c0_i32_1 : i32, i32, i32
  }
  func.func @transform_8(%arg0: i32) -> (i32, i32) {
    %c0_i32 = arith.constant 0 : i32
    %c0_i32_0 = arith.constant 0 : i32
    %c0_i32_1 = arith.constant 0 : i32
    return %c0_i32, %c0_i32_0 : i32, i32
  }
  func.func @transform_9(%arg0: i32) -> (i32, i32) {
    %c0_i32 = arith.constant 0 : i32
    %c0_i32_0 = arith.constant 0 : i32
    return %arg0, %c0_i32 : i32, i32
  }
  func.func @transform_10(%arg0: i32) -> (i32, i32, i32, i32) {
    %c0_i32 = arith.constant 0 : i32
    %c0_i32_0 = arith.constant 0 : i32
    %c0_i32_1 = arith.constant 0 : i32
    %c0_i32_2 = arith.constant 0 : i32
    return %arg0, %c0_i32, %c0_i32_0, %c0_i32_1 : i32, i32, i32, i32
  }
}

</mosaic_0001>

<llo_original>
// kernel: tpu_custom_call.1
$region0: #{tpu_custom_call.1}
  #allocation0 [shape = 'u32[]', space=smem, size = 0x4, offset = 0x4, fixed_abs, tag = 'smem constant byte address 0x4 - core index']
  #allocation1 [shape = 'u32[144,128]{1,0:T(1,128)}', space=vmem, size = 0x12000, scoped, tag = 'internal scratch']
  %s0 = inlined_call_operand.vmem [shape: f32[16,32], index: 0, kind: input, shape index: {}]
  %s1 = inlined_call_operand.vmem [shape: f32[16,32], index: 1, kind: input, shape index: {}]
  %s2 = inlined_call_operand.vmem [shape: f32[16,32], index: 2, kind: input, shape index: {}]
  %s3 = inlined_call_operand.vmem [shape: s8[2,8,8], index: 3, kind: input, shape index: {}]
  %s4 = inlined_call_operand.vmem [shape: bf16[4,32,8], index: 4, kind: input, shape index: {}]
  %s5 = inlined_call_operand.vmem [shape: bf16[4,32,8], index: 5, kind: input, shape index: {}]
  %s6 = inlined_call_operand.vmem [shape: bf16[4,32,8], index: 6, kind: input, shape index: {}]
  %s7 = inlined_call_operand.vmem [shape: bf16[4,8,32], index: 7, kind: input, shape index: {}]
  %s8 = inlined_call_operand.vmem [shape: f32[1,32], index: 8, kind: input, shape index: {}]
  %s9 = inlined_call_operand.hbm [shape: f32[16,32], index: 9, kind: output, shape index: {0}]
  %s10 = inlined_call_operand.hbm [shape: f32[2,4,8,8], index: 10, kind: output, shape index: {1}]
  %11 = xla_tuple %s9, %s10
  %s12 = sld [smem:[#allocation0]]
  $region77: #{tpu_custom_call.1} parent=0
    _
  %s14 = ssub.s32 1, %s12
  %s15 = scalar_select 0, %s14, %s12
  $region1: #{tpu_custom_call.1} parent=0
    #allocation2 [shape = 'u8[8192]{0}', space=vmem, size = 0x2000, scoped, tag = 'output window, operand 0']
    #allocation3 [shape = 's32[2]{0}', space=sflag, size = 0x8, scoped, tag = 'scoped memory for tpu_custom_call.1']
    #allocation4 [shape = 'u8[32768]{0}', space=vmem, size = 0x8000, scoped, tag = 'output window, operand 1']
    #allocation5 [shape = 's32[2]{0}', space=sflag, size = 0x8, scoped, tag = 'scoped memory for tpu_custom_call.1']
    %16 = vsyncpa [#allocation3], 0
    %s17 = scalar_lea.sflag [#allocation3], 1
    %18 = vsyncpa %s17, 0
    %19 = vsyncpa [#allocation5], 0
    %s20 = scalar_lea.sflag [#allocation5], 1
    %21 = vsyncpa %s20, 0
    loop: start=0, step=1, limit=4
    $region2: #{tpu_custom_call.1} parent=1 // loop_pre_header
      _
    $region3: #{tpu_custom_call.1} parent=1 // loop_header
      %s23 = sphi 0, %s27
      %p24 = scmp.ge.s32.totalorder %s23, 4
      %s33 = sphi 0, %s35
      %s36 = sphi 0, %s33
      %s37 = sphi 0, %s36
      %s53 = sphi 0, %s37
      %s59 = sphi 0, %s61
      %s62 = sphi 0, %s59
      %s63 = sphi 0, %s62
      %s79 = sphi 0, %s63
      %s85 = sphi 0, %s87
      %s88 = sphi 0, %s85
      %s89 = sphi 0, %s88
      %s105 = sphi 0, %s89
      %s111 = sphi 0, %s113
      %s114 = sphi 0, %s111
      %s115 = sphi 0, %s114
      %s131 = sphi 0, %s115
      %s135 = sphi 0, %s135
      %s137 = sphi 0, %s135
      %s138 = sphi 0, %s137
      %s152 = sphi 0, %s138
      %s156 = sphi 0, %s156
      %s158 = sphi 0, %s156
      %s159 = sphi 0, %s158
      %s173 = sphi 0, %s159
      %s177 = sphi 0, %s177
      %s179 = sphi 0, %s177
      %s180 = sphi 0, %s179
      %s194 = sphi 0, %s180
      %s198 = sphi 0, %s198
      %s200 = sphi 0, %s198
      %s201 = sphi 0, %s200
      %s215 = sphi 0, %s201
      %s219 = sphi 0, %s219
      %s221 = sphi 0, %s219
      %s222 = sphi 0, %s221
      %s236 = sphi 0, %s222
      %s242 = sphi 0, %s244
      %s245 = sphi 0, %s242
      %s246 = sphi 0, %s245
      %s262 = sphi 0, %s246
      %s268 = sphi 0, %s270
      %s271 = sphi 0, %s268
      %s272 = sphi 0, %s271
      %s288 = sphi 0, %s272
    $region4: #{tpu_custom_call.1} parent=1 // loop_header_branch
      %26 = sbr.rel (%p24) target = $region8
    $region5: #{tpu_custom_call.1} parent=1 // loop_body
      %s28 = ssub.s32 %s23, 1
      %s29 = ssub.s32 %s23, 2
      %s30 = sadd.s32 %s23, 1
      %s31 = ssub.s32 %s23, %s30
      %p32 = scmp.eq.s32.totalorder %s31, 0
      %s34 = sadd.s32 %s33, 1
      %s35 = scalar_select %p32, %s33, %s34
      %p38 = pneg %p32
      %p39 = scmp.eq.s32.totalorder %s23, 1
      %p40 = por %p38, %p39
      %p41 = scmp.ne.s32.totalorder %s33, %s36
      %p42 = scmp.eq.s32.totalorder %s23, 0
      %p43 = por %p41, %p42
      %p44 = scmp.ne.s32.totalorder %s33, %s36
      %p45 = scmp.eq.s32.totalorder %s28, 1
      %p46 = por %p44, %p45
      %p47 = scmp.ne.s32.totalorder %s36, %s37
      %p48 = scmp.eq.s32.totalorder %s28, 0
      %p49 = por %p47, %p48
      %p50 = scmp.ne.s32.totalorder %s36, %s37
      %p51 = scmp.eq.s32.totalorder %s29, 1
      %p52 = por %p50, %p51
      %p54 = scmp.ne.s32.totalorder %s37, %s53
      %p55 = scmp.eq.s32.totalorder %s29, 0
      %p56 = por %p54, %p55
      %s57 = ssub.s32 %s23, %s30
      %p58 = scmp.eq.s32.totalorder %s57, 0
      %s60 = sadd.s32 %s59, 1
      %s61 = scalar_select %p58, %s59, %s60
      %p64 = pneg %p58
      %p65 = scmp.eq.s32.totalorder %s23, 1
      %p66 = por %p64, %p65
      %p67 = scmp.ne.s32.totalorder %s59, %s62
      %p68 = scmp.eq.s32.totalorder %s23, 0
      %p69 = por %p67, %p68
      %p70 = scmp.ne.s32.totalorder %s59, %s62
      %p71 = scmp.eq.s32.totalorder %s28, 1
      %p72 = por %p70, %p71
      %p73 = scmp.ne.s32.totalorder %s62, %s63
      %p74 = scmp.eq.s32.totalorder %s28, 0
      %p75 = por %p73, %p74
      %p76 = scmp.ne.s32.totalorder %s62, %s63
      %p77 = scmp.eq.s32.totalorder %s29, 1
      %p78 = por %p76, %p77
      %p80 = scmp.ne.s32.totalorder %s63, %s79
      %p81 = scmp.eq.s32.totalorder %s29, 0
      %p82 = por %p80, %p81
      %s83 = ssub.s32 %s23, %s30
      %p84 = scmp.eq.s32.totalorder %s83, 0
      %s86 = sadd.s32 %s85, 1
      %s87 = scalar_select %p84, %s85, %s86
      %p90 = pneg %p84
      %p91 = scmp.eq.s32.totalorder %s23, 1
      %p92 = por %p90, %p91
      %p93 = scmp.ne.s32.totalorder %s85, %s88
      %p94 = scmp.eq.s32.totalorder %s23, 0
      %p95 = por %p93, %p94
      %p96 = scmp.ne.s32.totalorder %s85, %s88
      %p97 = scmp.eq.s32.totalorder %s28, 1
      %p98 = por %p96, %p97
      %p99 = scmp.ne.s32.totalorder %s88, %s89
      %p100 = scmp.eq.s32.totalorder %s28, 0
      %p101 = por %p99, %p100
      %p102 = scmp.ne.s32.totalorder %s88, %s89
      %p103 = scmp.eq.s32.totalorder %s29, 1
      %p104 = por %p102, %p103
      %p106 = scmp.ne.s32.totalorder %s89, %s105
      %p107 = scmp.eq.s32.totalorder %s29, 0
      %p108 = por %p106, %p107
      %s109 = ssub.s32 %s23, %s30
      %p110 = scmp.eq.s32.totalorder %s109, 0
      %s112 = sadd.s32 %s111, 1
      %s113 = scalar_select %p110, %s111, %s112
      %p116 = pneg %p110
      %p117 = scmp.eq.s32.totalorder %s23, 1
      %p118 = por %p116, %p117
      %p119 = scmp.ne.s32.totalorder %s111, %s114
      %p120 = scmp.eq.s32.totalorder %s23, 0
      %p121 = por %p119, %p120
      %p122 = scmp.ne.s32.totalorder %s111, %s114
      %p123 = scmp.eq.s32.totalorder %s28, 1
      %p124 = por %p122, %p123
      %p125 = scmp.ne.s32.totalorder %s114, %s115
      %p126 = scmp.eq.s32.totalorder %s28, 0
      %p127 = por %p125, %p126
      %p128 = scmp.ne.s32.totalorder %s114, %s115
      %p129 = scmp.eq.s32.totalorder %s29, 1
      %p130 = por %p128, %p129
      %p132 = scmp.ne.s32.totalorder %s115, %s131
      %p133 = scmp.eq.s32.totalorder %s29, 0
      %p134 = por %p132, %p133
      %s136 = sadd.s32 %s135, 1
      %p139 = scmp.eq.s32.totalorder %s23, 1
      %p140 = scmp.ne.s32.totalorder %s135, %s137
      %p141 = scmp.eq.s32.totalorder %s23, 0
      %p142 = por %p140, %p141
      %p143 = scmp.ne.s32.totalorder %s135, %s137
      %p144 = scmp.eq.s32.totalorder %s28, 1
      %p145 = por %p143, %p144
      %p146 = scmp.ne.s32.totalorder %s137, %s138
      %p147 = scmp.eq.s32.totalorder %s28, 0
      %p148 = por %p146, %p147
      %p149 = scmp.ne.s32.totalorder %s137, %s138
      %p150 = scmp.eq.s32.totalorder %s29, 1
      %p151 = por %p149, %p150
      %p153 = scmp.ne.s32.totalorder %s138, %s152
      %p154 = scmp.eq.s32.totalorder %s29, 0
      %p155 = por %p153, %p154
      %s157 = sadd.s32 %s156, 1
      %p160 = scmp.eq.s32.totalorder %s23, 1
      %p161 = scmp.ne.s32.totalorder %s156, %s158
      %p162 = scmp.eq.s32.totalorder %s23, 0
      %p163 = por %p161, %p162
      %p164 = scmp.ne.s32.totalorder %s156, %s158
      %p165 = scmp.eq.s32.totalorder %s28, 1
      %p166 = por %p164, %p165
      %p167 = scmp.ne.s32.totalorder %s158, %s159
      %p168 = scmp.eq.s32.totalorder %s28, 0
      %p169 = por %p167, %p168
      %p170 = scmp.ne.s32.totalorder %s158, %s159
      %p171 = scmp.eq.s32.totalorder %s29, 1
      %p172 = por %p170, %p171
      %p174 = scmp.ne.s32.totalorder %s159, %s173
      %p175 = scmp.eq.s32.totalorder %s29, 0
      %p176 = por %p174, %p175
      %s178 = sadd.s32 %s177, 1
      %p181 = scmp.eq.s32.totalorder %s23, 1
      %p182 = scmp.ne.s32.totalorder %s177, %s179
      %p183 = scmp.eq.s32.totalorder %s23, 0
      %p184 = por %p182, %p183
      %p185 = scmp.ne.s32.totalorder %s177, %s179
      %p186 = scmp.eq.s32.totalorder %s28, 1
      %p187 = por %p185, %p186
      %p188 = scmp.ne.s32.totalorder %s179, %s180
      %p189 = scmp.eq.s32.totalorder %s28, 0
      %p190 = por %p188, %p189
      %p191 = scmp.ne.s32.totalorder %s179, %s180
      %p192 = scmp.eq.s32.totalorder %s29, 1
      %p193 = por %p191, %p192
      %p195 = scmp.ne.s32.totalorder %s180, %s194
      %p196 = scmp.eq.s32.totalorder %s29, 0
      %p197 = por %p195, %p196
      %s199 = sadd.s32 %s198, 1
      %p202 = scmp.eq.s32.totalorder %s23, 1
      %p203 = scmp.ne.s32.totalorder %s198, %s200
      %p204 = scmp.eq.s32.totalorder %s23, 0
      %p205 = por %p203, %p204
      %p206 = scmp.ne.s32.totalorder %s198, %s200
      %p207 = scmp.eq.s32.totalorder %s28, 1
      %p208 = por %p206, %p207
      %p209 = scmp.ne.s32.totalorder %s200, %s201
      %p210 = scmp.eq.s32.totalorder %s28, 0
      %p211 = por %p209, %p210
      %p212 = scmp.ne.s32.totalorder %s200, %s201
      %p213 = scmp.eq.s32.totalorder %s29, 1
      %p214 = por %p212, %p213
      %p216 = scmp.ne.s32.totalorder %s201, %s215
      %p217 = scmp.eq.s32.totalorder %s29, 0
      %p218 = por %p216, %p217
      %s220 = sadd.s32 %s219, 1
      %p223 = scmp.eq.s32.totalorder %s23, 1
      %p224 = scmp.ne.s32.totalorder %s219, %s221
      %p225 = scmp.eq.s32.totalorder %s23, 0
      %p226 = por %p224, %p225
      %p227 = scmp.ne.s32.totalorder %s219, %s221
      %p228 = scmp.eq.s32.totalorder %s28, 1
      %p229 = por %p227, %p228
      %p230 = scmp.ne.s32.totalorder %s221, %s222
      %p231 = scmp.eq.s32.totalorder %s28, 0
      %p232 = por %p230, %p231
      %p233 = scmp.ne.s32.totalorder %s221, %s222
      %p234 = scmp.eq.s32.totalorder %s29, 1
      %p235 = por %p233, %p234
      %p237 = scmp.ne.s32.totalorder %s222, %s236
      %p238 = scmp.eq.s32.totalorder %s29, 0
      %p239 = por %p237, %p238
      %s240 = ssub.s32 %s23, %s30
      %p241 = scmp.eq.s32.totalorder %s240, 0
      %s243 = sadd.s32 %s242, 1
      %s244 = scalar_select %p241, %s242, %s243
      %p247 = pneg %p241
      %p248 = scmp.eq.s32.totalorder %s23, 1
      %p249 = por %p247, %p248
      %p250 = scmp.ne.s32.totalorder %s242, %s245
      %p251 = scmp.eq.s32.totalorder %s23, 0
      %p252 = por %p250, %p251
      %p253 = scmp.ne.s32.totalorder %s242, %s245
      %p254 = scmp.eq.s32.totalorder %s28, 1
      %p255 = por %p253, %p254
      %p256 = scmp.ne.s32.totalorder %s245, %s246
      %p257 = scmp.eq.s32.totalorder %s28, 0
      %p258 = por %p256, %p257
      %p259 = scmp.ne.s32.totalorder %s245, %s246
      %p260 = scmp.eq.s32.totalorder %s29, 1
      %p261 = por %p259, %p260
      %p263 = scmp.ne.s32.totalorder %s246, %s262
      %p264 = scmp.eq.s32.totalorder %s29, 0
      %p265 = por %p263, %p264
      %s266 = ssub.s32 %s23, %s30
      %p267 = scmp.eq.s32.totalorder %s266, 0
      %s269 = sadd.s32 %s268, 1
      %s270 = scalar_select %p267, %s268, %s269
      %p273 = pneg %p267
      %p274 = scmp.eq.s32.totalorder %s23, 1
      %p275 = por %p273, %p274
      %p276 = scmp.ne.s32.totalorder %s268, %s271
      %p277 = scmp.eq.s32.totalorder %s23, 0
      %p278 = por %p276, %p277
      %p279 = scmp.ne.s32.totalorder %s268, %s271
      %p280 = scmp.eq.s32.totalorder %s28, 1
      %p281 = por %p279, %p280
      %p282 = scmp.ne.s32.totalorder %s271, %s272
      %p283 = scmp.eq.s32.totalorder %s28, 0
      %p284 = por %p282, %p283
      %p285 = scmp.ne.s32.totalorder %s271, %s272
      %p286 = scmp.eq.s32.totalorder %s29, 1
      %p287 = por %p285, %p286
      %p289 = scmp.ne.s32.totalorder %s272, %s288
      %p290 = scmp.eq.s32.totalorder %s29, 0
      %p291 = por %p289, %p290
      %p292 = scmp.le.s32.totalorder 1, %s23
      %p293 = scmp.lt.s32.totalorder %s23, 3
      %p294 = pnand %p292, %p293
      %p295 = pneg %p294
      // Predicated region
      $region9: #{tpu_custom_call.1} parent=5 // pred_check
        _
      $region10: #{tpu_custom_call.1} parent=5 // pred_check_branch
        %297 = sbr.rel (%p294) target = $region12
      $region11: #{tpu_custom_call.1} parent=5 // pred_region
        %s298 = ssub.s32 %s23, 1
        // Predicated region
        $region13: #{tpu_custom_call.1} parent=11 // pred_check
          %p299 = pneg %p148
        $region14: #{tpu_custom_call.1} parent=11 // pred_check_branch
          %301 = sbr.rel (%p299) target = $region16
        $region15: #{tpu_custom_call.1} parent=11 // pred_region
          _
        $region16: #{tpu_custom_call.1} parent=11 // pred_fallthru
          _
        // Predicated region
        $region17: #{tpu_custom_call.1} parent=11 // pred_check
          %p302 = pneg %p169
        $region18: #{tpu_custom_call.1} parent=11 // pred_check_branch
          %304 = sbr.rel (%p302) target = $region20
        $region19: #{tpu_custom_call.1} parent=11 // pred_region
          _
        $region20: #{tpu_custom_call.1} parent=11 // pred_fallthru
          _
        // Predicated region
        $region21: #{tpu_custom_call.1} parent=11 // pred_check
          %p305 = pneg %p190
        $region22: #{tpu_custom_call.1} parent=11 // pred_check_branch
          %307 = sbr.rel (%p305) target = $region24
        $region23: #{tpu_custom_call.1} parent=11 // pred_region
          _
        $region24: #{tpu_custom_call.1} parent=11 // pred_fallthru
          _
        // Predicated region
        $region25: #{tpu_custom_call.1} parent=11 // pred_check
          %p308 = pneg %p211
        $region26: #{tpu_custom_call.1} parent=11 // pred_check_branch
          %310 = sbr.rel (%p308) target = $region28
        $region27: #{tpu_custom_call.1} parent=11 // pred_region
          _
        $region28: #{tpu_custom_call.1} parent=11 // pred_fallthru
          _
        // Predicated region
        $region29: #{tpu_custom_call.1} parent=11 // pred_check
          %p311 = pneg %p232
        $region30: #{tpu_custom_call.1} parent=11 // pred_check_branch
          %313 = sbr.rel (%p311) target = $region32
        $region31: #{tpu_custom_call.1} parent=11 // pred_region
          _
        $region32: #{tpu_custom_call.1} parent=11 // pred_fallthru
          _
      $region12: #{tpu_custom_call.1} parent=5 // pred_fallthru
        _
      %p314 = scmp.lt.s32.totalorder %s23, 2
      // Predicated region
      $region33: #{tpu_custom_call.1} parent=5 // pred_check
        %p315 = pneg %p314
      $region34: #{tpu_custom_call.1} parent=5 // pred_check_branch
        %317 = sbr.rel (%p315) target = $region36
      $region35: #{tpu_custom_call.1} parent=5 // pred_region
        // Predicated region
        $region37: #{tpu_custom_call.1} parent=35 // pred_check
          %p318 = pneg %p43
        $region38: #{tpu_custom_call.1} parent=35 // pred_check_branch
          %320 = sbr.rel (%p318) target = $region40
        $region39: #{tpu_custom_call.1} parent=35 // pred_region
          %p321 = scmp.lt.s32.totalorder %s23, 1
          %s322 = scalar_select %p321, %s23, 1
          %s323 = smul.addr %s322, 8
          %s324 = scalar_lea.vmem %s0, %s323
        $region40: #{tpu_custom_call.1} parent=35 // pred_fallthru
          _
        // Predicated region
        $region41: #{tpu_custom_call.1} parent=35 // pred_check
          %p325 = pneg %p69
        $region42: #{tpu_custom_call.1} parent=35 // pred_check_branch
          %327 = sbr.rel (%p325) target = $region44
        $region43: #{tpu_custom_call.1} parent=35 // pred_region
          %p328 = scmp.lt.s32.totalorder %s23, 1
          %s329 = scalar_select %p328, %s23, 1
          %s330 = smul.addr %s329, 8
          %s331 = scalar_lea.vmem %s1, %s330
        $region44: #{tpu_custom_call.1} parent=35 // pred_fallthru
          _
        // Predicated region
        $region45: #{tpu_custom_call.1} parent=35 // pred_check
          %p332 = pneg %p95
        $region46: #{tpu_custom_call.1} parent=35 // pred_check_branch
          %334 = sbr.rel (%p332) target = $region48
        $region47: #{tpu_custom_call.1} parent=35 // pred_region
          %p335 = scmp.lt.s32.totalorder %s23, 1
          %s336 = scalar_select %p335, %s23, 1
          %s337 = smul.addr %s336, 8
          %s338 = scalar_lea.vmem %s2, %s337
        $region48: #{tpu_custom_call.1} parent=35 // pred_fallthru
          _
        // Predicated region
        $region49: #{tpu_custom_call.1} parent=35 // pred_check
          %p339 = pneg %p121
        $region50: #{tpu_custom_call.1} parent=35 // pred_check_branch
          %341 = sbr.rel (%p339) target = $region52
        $region51: #{tpu_custom_call.1} parent=35 // pred_region
          %p342 = scmp.lt.s32.totalorder %s23, 1
          %s343 = scalar_select %p342, %s23, 1
          %s344 = smul.addr %s343, 2
          %s345 = scalar_lea.vmem %s3, %s344
        $region52: #{tpu_custom_call.1} parent=35 // pred_fallthru
          _
      $region36: #{tpu_custom_call.1} parent=5 // pred_fallthru
        _
      %p346 = scmp.le.s32.totalorder 1, %s23
      %p347 = scmp.lt.s32.totalorder %s23, 3
      %p348 = pnand %p346, %p347
      %p349 = pneg %p348
      // Predicated region
      $region53: #{tpu_custom_call.1} parent=5 // pred_check
        _
      $region54: #{tpu_custom_call.1} parent=5 // pred_check_branch
        %351 = sbr.rel (%p348) target = $region56
      $region55: #{tpu_custom_call.1} parent=5 // pred_region
        %s352 = ssub.s32 %s23, 1
        %p353 = scmp.lt.s32.totalorder %s28, 1
        %s354 = scalar_select %p353, %s28, 1
        %s355 = smul.addr %s354, 8
        %s356 = scalar_lea.vmem %s0, %s355
        %p357 = pneg %p49
        %p358 = pneg %p46
        %p359 = scmp.lt.s32.totalorder %s28, 1
        %s360 = scalar_select %p359, %s28, 1
        %s361 = smul.addr %s360, 8
        %s362 = scalar_lea.vmem %s1, %s361
        %p363 = pneg %p75
        %p364 = pneg %p72
        %p365 = scmp.lt.s32.totalorder %s28, 1
        %s366 = scalar_select %p365, %s28, 1
        %s367 = smul.addr %s366, 8
        %s368 = scalar_lea.vmem %s2, %s367
        %p369 = pneg %p101
        %p370 = pneg %p98
        %p371 = scmp.lt.s32.totalorder %s28, 1
        %s372 = scalar_select %p371, %s28, 1
        %s373 = smul.addr %s372, 2
        %s374 = scalar_lea.vmem %s3, %s373
        %p375 = pneg %p127
        %p376 = pneg %p124
        %p377 = pneg %p148
        %p378 = pneg %p145
        %p379 = pneg %p169
        %p380 = pneg %p166
        %p381 = pneg %p190
        %p382 = pneg %p187
        %p383 = pneg %p211
        %p384 = pneg %p208
        %p385 = pneg %p232
        %p386 = pneg %p229
        %p387 = pneg %p258
        %p388 = pneg %p255
        %s389 = sand.u32 %s245, 1
        %s390 = scalar_lea.sflag [#allocation3], %s389
        %s391 = sand.u32 %s245, 1
        %s392 = smul.addr %s391, 8
        %s393 = scalar_lea.vmem [#allocation2], %s392
        %p394 = pneg %p284
        %p395 = pneg %p281
        %s396 = sand.u32 %s271, 1
        %s397 = scalar_lea.sflag [#allocation5], %s396
        %s398 = sand.u32 %s271, 1
        %s399 = smul.addr %s398, 32
        %s400 = scalar_lea.vmem [#allocation4], %s399
        %p401 = scmp.lt.s32.totalorder %s28, 1
        %s402 = scalar_select %p401, %s28, 1
        %s403 = smul.addr %s402, 8
        %s404 = scalar_lea.vmem %s0, %s403
        %p405 = scmp.lt.s32.totalorder %s28, 1
        %s406 = scalar_select %p405, %s28, 1
        %s407 = smul.addr %s406, 8
        %s408 = scalar_lea.vmem %s1, %s407
        %p409 = scmp.lt.s32.totalorder %s28, 1
        %s410 = scalar_select %p409, %s28, 1
        %s411 = smul.addr %s410, 8
        %s412 = scalar_lea.vmem %s2, %s411
        %p413 = scmp.lt.s32.totalorder %s28, 1
        %s414 = scalar_select %p413, %s28, 1
        %s415 = smul.addr %s414, 2
        %s416 = scalar_lea.vmem %s3, %s415
        %v418 = vld [vmem:[%s404] sm:$0xff]
        %v419 = vmul.f32 %v418, 0.35355338
        %v420 = vpack.c.bf16 %v419, %v419
        %v421 = vld [vmem:[%s408] sm:$0xff]
        %v422 = vpack.c.bf16 %v421, %v421
        %v423 = vld [vmem:[%s412] sm:$0xff]
        %v424 = vpack.c.bf16 %v423, %v423
        %v425 = vld [vmem:[%s4] sm:$0xf]
        %v426 = vld [vmem:[%s4 + $0x4] sm:$0xf]
        %v427 = vld [vmem:[%s4 + $0x8] sm:$0xf]
        %v428 = vld [vmem:[%s4 + $0xc] sm:$0xf]
        %v429 = vld [vmem:[%s4 + $0x10] sm:$0xf]
        %v430 = vld [vmem:[%s4 + $0x14] sm:$0xf]
        %v431 = vld [vmem:[%s4 + $0x18] sm:$0xf]
        %v432 = vld [vmem:[%s4 + $0x1c] sm:$0xf]
        %v433 = vld [vmem:[%s4 + $0x20] sm:$0xf]
        %v434 = vld [vmem:[%s4 + $0x24] sm:$0xf]
        %v435 = vld [vmem:[%s4 + $0x28] sm:$0xf]
        %v436 = vld [vmem:[%s4 + $0x2c] sm:$0xf]
        %v437 = vld [vmem:[%s4 + $0x30] sm:$0xf]
        %v438 = vld [vmem:[%s4 + $0x34] sm:$0xf]
        %v439 = vld [vmem:[%s4 + $0x38] sm:$0xf]
        %v440 = vld [vmem:[%s4 + $0x3c] sm:$0xf]
        %v445 = vunpack.c.l.b16 %v425
        %v446 = vunpack.c.l.b16 %v426
        %v447 = vunpack.c.l.b16 %v427
        %v448 = vunpack.c.l.b16 %v428
        %v449 = vpack.c.b16 %v446, %v445
        %v450 = vpack.c.b16 %v448, %v447
        %vm453 = vcmask 261120
        %v455 = vsel %vm453, %v420, 0
        %457 = vmatprep.subr.bf16.mxu0 0
        %458 = vmatpush1.bf16.msra.mxu0 0
        %459 = vmatprep.subr.bf16.mxu0 0
        %460 = vmatpush1.bf16.msra.mxu0 0
        %461 = vmatprep.subr.bf16.mxu0 0
        %462 = vmatpush1.bf16.msra.mxu0 0
        %463 = vmatprep.subr.bf16.mxu0 0
        %464 = vmatpush1.bf16.msra.mxu0 0
        %465 = vmatprep.subr.bf16.mxu0 0
        %466 = vmatpush1.bf16.msra.mxu0 0
        %467 = vmatprep.subr.bf16.mxu0 0
        %468 = vmatpush1.bf16.msra.mxu0 0
        %469 = vmatprep.subr.bf16.mxu0 0
        %470 = vmatpush1.bf16.msra.mxu0 %v450
        %471 = vmatprep.subr.bf16.mxu0 0
        %472 = vmatpush1.bf16.msra.mxu0 %v449
        %473 = vmatprep.subr.bf16.mxu0 0
        %474 = vmatpush2.bf16.msra.mxu0 0
        %475 = vmatprep.subr.bf16.mxu0 0
        %476 = vmatpush2.bf16.msra.mxu0 0
        %477 = vmatprep.subr.bf16.mxu0 0
        %478 = vmatpush2.bf16.msra.mxu0 0
        %479 = vmatprep.subr.bf16.mxu0 0
        %480 = vmatpush2.bf16.msra.mxu0 0
        %481 = vmatprep.subr.bf16.mxu0 0
        %482 = vmatpush2.bf16.msra.mxu0 0
        %483 = vmatprep.subr.bf16.mxu0 0
        %484 = vmatpush2.bf16.msra.mxu0 0
        %485 = vmatprep.subr.bf16.mxu0 0
        %486 = vmatpush2.bf16.msra.mxu0 0
        %487 = vmatprep.subr.bf16.mxu0 0
        %488 = vmatpush2.bf16.msra.mxu0 0
        %489 = vmatprep.mubr.bf16.mxu0 0
        %490 = vmatmul.mubr.bf16.gmra.mxu0 %v455
        %v491 = vpop.f32.mrf.mxu0
        %v492 = vadd.f32 0.0, %v491
        %v493 = vpop.f32.mrf.mxu0
        %v494 = vpop.f32.mrf.mxu0
        %v495 = vpop.f32.mrf.mxu0
        %496 = vdwg.mxu0
        %v501 = vunpack.c.l.b16 %v429
        %v502 = vunpack.c.l.b16 %v430
        %v503 = vunpack.c.l.b16 %v431
        %v504 = vunpack.c.l.b16 %v432
        %v505 = vpack.c.b16 %v502, %v501
        %v506 = vpack.c.b16 %v504, %v503
        %509 = vmatprep.subr.bf16.mxu0 0
        %510 = vmatpush1.bf16.msra.mxu0 0
        %511 = vmatprep.subr.bf16.mxu0 0
        %512 = vmatpush1.bf16.msra.mxu0 0
        %513 = vmatprep.subr.bf16.mxu0 0
        %514 = vmatpush1.bf16.msra.mxu0 0
        %515 = vmatprep.subr.bf16.mxu0 0
        %516 = vmatpush1.bf16.msra.mxu0 0
        %517 = vmatprep.subr.bf16.mxu0 0
        %518 = vmatpush1.bf16.msra.mxu0 0
        %519 = vmatprep.subr.bf16.mxu0 0
        %520 = vmatpush1.bf16.msra.mxu0 0
        %521 = vmatprep.subr.bf16.mxu0 0
        %522 = vmatpush1.bf16.msra.mxu0 %v506
        %523 = vmatprep.subr.bf16.mxu0 0
        %524 = vmatpush1.bf16.msra.mxu0 %v505
        %525 = vmatprep.subr.bf16.mxu0 0
        %526 = vmatpush2.bf16.msra.mxu0 0
        %527 = vmatprep.subr.bf16.mxu0 0
        %528 = vmatpush2.bf16.msra.mxu0 0
        %529 = vmatprep.subr.bf16.mxu0 0
        %530 = vmatpush2.bf16.msra.mxu0 0
        %531 = vmatprep.subr.bf16.mxu0 0
        %532 = vmatpush2.bf16.msra.mxu0 0
        %533 = vmatprep.subr.bf16.mxu0 0
        %534 = vmatpush2.bf16.msra.mxu0 0
        %535 = vmatprep.subr.bf16.mxu0 0
        %536 = vmatpush2.bf16.msra.mxu0 0
        %537 = vmatprep.subr.bf16.mxu0 0
        %538 = vmatpush2.bf16.msra.mxu0 0
        %539 = vmatprep.subr.bf16.mxu0 0
        %540 = vmatpush2.bf16.msra.mxu0 0
        %541 = vmatprep.mubr.bf16.mxu0 0
        %542 = vmatmul.mubr.bf16.gmra.mxu0 %v455
        %v543 = vpop.f32.mrf.mxu0
        %v544 = vadd.f32 0.0, %v543
        %v545 = vpop.f32.mrf.mxu0
        %v546 = vpop.f32.mrf.mxu0
        %v547 = vpop.f32.mrf.mxu0
        %548 = vdwg.mxu0
        %v553 = vunpack.c.l.b16 %v433
        %v554 = vunpack.c.l.b16 %v434
        %v555 = vunpack.c.l.b16 %v435
        %v556 = vunpack.c.l.b16 %v436
        %v557 = vpack.c.b16 %v554, %v553
        %v558 = vpack.c.b16 %v556, %v555
        %561 = vmatprep.subr.bf16.mxu0 0
        %562 = vmatpush1.bf16.msra.mxu0 0
        %563 = vmatprep.subr.bf16.mxu0 0
        %564 = vmatpush1.bf16.msra.mxu0 0
        %565 = vmatprep.subr.bf16.mxu0 0
        %566 = vmatpush1.bf16.msra.mxu0 0
        %567 = vmatprep.subr.bf16.mxu0 0
        %568 = vmatpush1.bf16.msra.mxu0 0
        %569 = vmatprep.subr.bf16.mxu0 0
        %570 = vmatpush1.bf16.msra.mxu0 0
        %571 = vmatprep.subr.bf16.mxu0 0
        %572 = vmatpush1.bf16.msra.mxu0 0
        %573 = vmatprep.subr.bf16.mxu0 0
        %574 = vmatpush1.bf16.msra.mxu0 %v558
        %575 = vmatprep.subr.bf16.mxu0 0
        %576 = vmatpush1.bf16.msra.mxu0 %v557
        %577 = vmatprep.subr.bf16.mxu0 0
        %578 = vmatpush2.bf16.msra.mxu0 0
        %579 = vmatprep.subr.bf16.mxu0 0
        %580 = vmatpush2.bf16.msra.mxu0 0
        %581 = vmatprep.subr.bf16.mxu0 0
        %582 = vmatpush2.bf16.msra.mxu0 0
        %583 = vmatprep.subr.bf16.mxu0 0
        %584 = vmatpush2.bf16.msra.mxu0 0
        %585 = vmatprep.subr.bf16.mxu0 0
        %586 = vmatpush2.bf16.msra.mxu0 0
        %587 = vmatprep.subr.bf16.mxu0 0
        %588 = vmatpush2.bf16.msra.mxu0 0
        %589 = vmatprep.subr.bf16.mxu0 0
        %590 = vmatpush2.bf16.msra.mxu0 0
        %591 = vmatprep.subr.bf16.mxu0 0
        %592 = vmatpush2.bf16.msra.mxu0 0
        %593 = vmatprep.mubr.bf16.mxu0 0
        %594 = vmatmul.mubr.bf16.gmra.mxu0 %v455
        %v595 = vpop.f32.mrf.mxu0
        %v596 = vadd.f32 0.0, %v595
        %v597 = vpop.f32.mrf.mxu0
        %v598 = vpop.f32.mrf.mxu0
        %v599 = vpop.f32.mrf.mxu0
        %600 = vdwg.mxu0
        %v605 = vunpack.c.l.b16 %v437
        %v606 = vunpack.c.l.b16 %v438
        %v607 = vunpack.c.l.b16 %v439
        %v608 = vunpack.c.l.b16 %v440
        %v609 = vpack.c.b16 %v606, %v605
        %v610 = vpack.c.b16 %v608, %v607
        %613 = vmatprep.subr.bf16.mxu0 0
        %614 = vmatpush1.bf16.msra.mxu0 0
        %615 = vmatprep.subr.bf16.mxu0 0
        %616 = vmatpush1.bf16.msra.mxu0 0
        %617 = vmatprep.subr.bf16.mxu0 0
        %618 = vmatpush1.bf16.msra.mxu0 0
        %619 = vmatprep.subr.bf16.mxu0 0
        %620 = vmatpush1.bf16.msra.mxu0 0
        %621 = vmatprep.subr.bf16.mxu0 0
        %622 = vmatpush1.bf16.msra.mxu0 0
        %623 = vmatprep.subr.bf16.mxu0 0
        %624 = vmatpush1.bf16.msra.mxu0 0
        %625 = vmatprep.subr.bf16.mxu0 0
        %626 = vmatpush1.bf16.msra.mxu0 %v610
        %627 = vmatprep.subr.bf16.mxu0 0
        %628 = vmatpush1.bf16.msra.mxu0 %v609
        %629 = vmatprep.subr.bf16.mxu0 0
        %630 = vmatpush2.bf16.msra.mxu0 0
        %631 = vmatprep.subr.bf16.mxu0 0
        %632 = vmatpush2.bf16.msra.mxu0 0
        %633 = vmatprep.subr.bf16.mxu0 0
        %634 = vmatpush2.bf16.msra.mxu0 0
        %635 = vmatprep.subr.bf16.mxu0 0
        %636 = vmatpush2.bf16.msra.mxu0 0
        %637 = vmatprep.subr.bf16.mxu0 0
        %638 = vmatpush2.bf16.msra.mxu0 0
        %639 = vmatprep.subr.bf16.mxu0 0
        %640 = vmatpush2.bf16.msra.mxu0 0
        %641 = vmatprep.subr.bf16.mxu0 0
        %642 = vmatpush2.bf16.msra.mxu0 0
        %643 = vmatprep.subr.bf16.mxu0 0
        %644 = vmatpush2.bf16.msra.mxu0 0
        %645 = vmatprep.mubr.bf16.mxu0 0
        %646 = vmatmul.mubr.bf16.gmra.mxu0 %v455
        %v647 = vpop.f32.mrf.mxu0
        %v648 = vadd.f32 0.0, %v647
        %v649 = vpop.f32.mrf.mxu0
        %v650 = vpop.f32.mrf.mxu0
        %v651 = vpop.f32.mrf.mxu0
        %652 = vdwg.mxu0
        %v653 = vld [vmem:[%s5] sm:$0xf]
        %v654 = vld [vmem:[%s5 + $0x4] sm:$0xf]
        %v655 = vld [vmem:[%s5 + $0x8] sm:$0xf]
        %v656 = vld [vmem:[%s5 + $0xc] sm:$0xf]
        %v657 = vld [vmem:[%s5 + $0x10] sm:$0xf]
        %v658 = vld [vmem:[%s5 + $0x14] sm:$0xf]
        %v659 = vld [vmem:[%s5 + $0x18] sm:$0xf]
        %v660 = vld [vmem:[%s5 + $0x1c] sm:$0xf]
        %v661 = vld [vmem:[%s5 + $0x20] sm:$0xf]
        %v662 = vld [vmem:[%s5 + $0x24] sm:$0xf]
        %v663 = vld [vmem:[%s5 + $0x28] sm:$0xf]
        %v664 = vld [vmem:[%s5 + $0x2c] sm:$0xf]
        %v665 = vld [vmem:[%s5 + $0x30] sm:$0xf]
        %v666 = vld [vmem:[%s5 + $0x34] sm:$0xf]
        %v667 = vld [vmem:[%s5 + $0x38] sm:$0xf]
        %v668 = vld [vmem:[%s5 + $0x3c] sm:$0xf]
        %v673 = vunpack.c.l.b16 %v653
        %v674 = vunpack.c.l.b16 %v654
        %v675 = vunpack.c.l.b16 %v655
        %v676 = vunpack.c.l.b16 %v656
        %v677 = vpack.c.b16 %v674, %v673
        %v678 = vpack.c.b16 %v676, %v675
        %v682 = vsel %vm453, %v422, 0
        %684 = vmatprep.subr.bf16.mxu0 0
        %685 = vmatpush1.bf16.msra.mxu0 0
        %686 = vmatprep.subr.bf16.mxu0 0
        %687 = vmatpush1.bf16.msra.mxu0 0
        %688 = vmatprep.subr.bf16.mxu0 0
        %689 = vmatpush1.bf16.msra.mxu0 0
        %690 = vmatprep.subr.bf16.mxu0 0
        %691 = vmatpush1.bf16.msra.mxu0 0
        %692 = vmatprep.subr.bf16.mxu0 0
        %693 = vmatpush1.bf16.msra.mxu0 0
        %694 = vmatprep.subr.bf16.mxu0 0
        %695 = vmatpush1.bf16.msra.mxu0 0
        %696 = vmatprep.subr.bf16.mxu0 0
        %697 = vmatpush1.bf16.msra.mxu0 %v678
        %698 = vmatprep.subr.bf16.mxu0 0
        %699 = vmatpush1.bf16.msra.mxu0 %v677
        %700 = vmatprep.subr.bf16.mxu0 0
        %701 = vmatpush2.bf16.msra.mxu0 0
        %702 = vmatprep.subr.bf16.mxu0 0
        %703 = vmatpush2.bf16.msra.mxu0 0
        %704 = vmatprep.subr.bf16.mxu0 0
        %705 = vmatpush2.bf16.msra.mxu0 0
        %706 = vmatprep.subr.bf16.mxu0 0
        %707 = vmatpush2.bf16.msra.mxu0 0
        %708 = vmatprep.subr.bf16.mxu0 0
        %709 = vmatpush2.bf16.msra.mxu0 0
        %710 = vmatprep.subr.bf16.mxu0 0
        %711 = vmatpush2.bf16.msra.mxu0 0
        %712 = vmatprep.subr.bf16.mxu0 0
        %713 = vmatpush2.bf16.msra.mxu0 0
        %714 = vmatprep.subr.bf16.mxu0 0
        %715 = vmatpush2.bf16.msra.mxu0 0
        %716 = vmatprep.mubr.bf16.mxu0 0
        %717 = vmatmul.mubr.bf16.gmra.mxu0 %v682
        %v718 = vpop.f32.mrf.mxu0
        %v719 = vadd.f32 0.0, %v718
        %v720 = vpop.f32.mrf.mxu0
        %v721 = vpop.f32.mrf.mxu0
        %v722 = vpop.f32.mrf.mxu0
        %723 = vdwg.mxu0
        %v728 = vunpack.c.l.b16 %v657
        %v729 = vunpack.c.l.b16 %v658
        %v730 = vunpack.c.l.b16 %v659
        %v731 = vunpack.c.l.b16 %v660
        %v732 = vpack.c.b16 %v729, %v728
        %v733 = vpack.c.b16 %v731, %v730
        %736 = vmatprep.subr.bf16.mxu0 0
        %737 = vmatpush1.bf16.msra.mxu0 0
        %738 = vmatprep.subr.bf16.mxu0 0
        %739 = vmatpush1.bf16.msra.mxu0 0
        %740 = vmatprep.subr.bf16.mxu0 0
        %741 = vmatpush1.bf16.msra.mxu0 0
        %742 = vmatprep.subr.bf16.mxu0 0
        %743 = vmatpush1.bf16.msra.mxu0 0
        %744 = vmatprep.subr.bf16.mxu0 0
        %745 = vmatpush1.bf16.msra.mxu0 0
        %746 = vmatprep.subr.bf16.mxu0 0
        %747 = vmatpush1.bf16.msra.mxu0 0
        %748 = vmatprep.subr.bf16.mxu0 0
        %749 = vmatpush1.bf16.msra.mxu0 %v733
        %750 = vmatprep.subr.bf16.mxu0 0
        %751 = vmatpush1.bf16.msra.mxu0 %v732
        %752 = vmatprep.subr.bf16.mxu0 0
        %753 = vmatpush2.bf16.msra.mxu0 0
        %754 = vmatprep.subr.bf16.mxu0 0
        %755 = vmatpush2.bf16.msra.mxu0 0
        %756 = vmatprep.subr.bf16.mxu0 0
        %757 = vmatpush2.bf16.msra.mxu0 0
        %758 = vmatprep.subr.bf16.mxu0 0
        %759 = vmatpush2.bf16.msra.mxu0 0
        %760 = vmatprep.subr.bf16.mxu0 0
        %761 = vmatpush2.bf16.msra.mxu0 0
        %762 = vmatprep.subr.bf16.mxu0 0
        %763 = vmatpush2.bf16.msra.mxu0 0
        %764 = vmatprep.subr.bf16.mxu0 0
        %765 = vmatpush2.bf16.msra.mxu0 0
        %766 = vmatprep.subr.bf16.mxu0 0
        %767 = vmatpush2.bf16.msra.mxu0 0
        %768 = vmatprep.mubr.bf16.mxu0 0
        %769 = vmatmul.mubr.bf16.gmra.mxu0 %v682
        %v770 = vpop.f32.mrf.mxu0
        %v771 = vadd.f32 0.0, %v770
        %v772 = vpop.f32.mrf.mxu0
        %v773 = vpop.f32.mrf.mxu0
        %v774 = vpop.f32.mrf.mxu0
        %775 = vdwg.mxu0
        %v780 = vunpack.c.l.b16 %v661
        %v781 = vunpack.c.l.b16 %v662
        %v782 = vunpack.c.l.b16 %v663
        %v783 = vunpack.c.l.b16 %v664
        %v784 = vpack.c.b16 %v781, %v780
        %v785 = vpack.c.b16 %v783, %v782
        %788 = vmatprep.subr.bf16.mxu0 0
        %789 = vmatpush1.bf16.msra.mxu0 0
        %790 = vmatprep.subr.bf16.mxu0 0
        %791 = vmatpush1.bf16.msra.mxu0 0
        %792 = vmatprep.subr.bf16.mxu0 0
        %793 = vmatpush1.bf16.msra.mxu0 0
        %794 = vmatprep.subr.bf16.mxu0 0
        %795 = vmatpush1.bf16.msra.mxu0 0
        %796 = vmatprep.subr.bf16.mxu0 0
        %797 = vmatpush1.bf16.msra.mxu0 0
        %798 = vmatprep.subr.bf16.mxu0 0
        %799 = vmatpush1.bf16.msra.mxu0 0
        %800 = vmatprep.subr.bf16.mxu0 0
        %801 = vmatpush1.bf16.msra.mxu0 %v785
        %802 = vmatprep.subr.bf16.mxu0 0
        %803 = vmatpush1.bf16.msra.mxu0 %v784
        %804 = vmatprep.subr.bf16.mxu0 0
        %805 = vmatpush2.bf16.msra.mxu0 0
        %806 = vmatprep.subr.bf16.mxu0 0
        %807 = vmatpush2.bf16.msra.mxu0 0
        %808 = vmatprep.subr.bf16.mxu0 0
        %809 = vmatpush2.bf16.msra.mxu0 0
        %810 = vmatprep.subr.bf16.mxu0 0
        %811 = vmatpush2.bf16.msra.mxu0 0
        %812 = vmatprep.subr.bf16.mxu0 0
        %813 = vmatpush2.bf16.msra.mxu0 0
        %814 = vmatprep.subr.bf16.mxu0 0
        %815 = vmatpush2.bf16.msra.mxu0 0
        %816 = vmatprep.subr.bf16.mxu0 0
        %817 = vmatpush2.bf16.msra.mxu0 0
        %818 = vmatprep.subr.bf16.mxu0 0
        %819 = vmatpush2.bf16.msra.mxu0 0
        %820 = vmatprep.mubr.bf16.mxu0 0
        %821 = vmatmul.mubr.bf16.gmra.mxu0 %v682
        %v822 = vpop.f32.mrf.mxu0
        %v823 = vadd.f32 0.0, %v822
        %v824 = vpop.f32.mrf.mxu0
        %v825 = vpop.f32.mrf.mxu0
        %v826 = vpop.f32.mrf.mxu0
        %827 = vdwg.mxu0
        %v832 = vunpack.c.l.b16 %v665
        %v833 = vunpack.c.l.b16 %v666
        %v834 = vunpack.c.l.b16 %v667
        %v835 = vunpack.c.l.b16 %v668
        %v836 = vpack.c.b16 %v833, %v832
        %v837 = vpack.c.b16 %v835, %v834
        %840 = vmatprep.subr.bf16.mxu0 0
        %841 = vmatpush1.bf16.msra.mxu0 0
        %842 = vmatprep.subr.bf16.mxu0 0
        %843 = vmatpush1.bf16.msra.mxu0 0
        %844 = vmatprep.subr.bf16.mxu0 0
        %845 = vmatpush1.bf16.msra.mxu0 0
        %846 = vmatprep.subr.bf16.mxu0 0
        %847 = vmatpush1.bf16.msra.mxu0 0
        %848 = vmatprep.subr.bf16.mxu0 0
        %849 = vmatpush1.bf16.msra.mxu0 0
        %850 = vmatprep.subr.bf16.mxu0 0
        %851 = vmatpush1.bf16.msra.mxu0 0
        %852 = vmatprep.subr.bf16.mxu0 0
        %853 = vmatpush1.bf16.msra.mxu0 %v837
        %854 = vmatprep.subr.bf16.mxu0 0
        %855 = vmatpush1.bf16.msra.mxu0 %v836
        %856 = vmatprep.subr.bf16.mxu0 0
        %857 = vmatpush2.bf16.msra.mxu0 0
        %858 = vmatprep.subr.bf16.mxu0 0
        %859 = vmatpush2.bf16.msra.mxu0 0
        %860 = vmatprep.subr.bf16.mxu0 0
        %861 = vmatpush2.bf16.msra.mxu0 0
        %862 = vmatprep.subr.bf16.mxu0 0
        %863 = vmatpush2.bf16.msra.mxu0 0
        %864 = vmatprep.subr.bf16.mxu0 0
        %865 = vmatpush2.bf16.msra.mxu0 0
        %866 = vmatprep.subr.bf16.mxu0 0
        %867 = vmatpush2.bf16.msra.mxu0 0
        %868 = vmatprep.subr.bf16.mxu0 0
        %869 = vmatpush2.bf16.msra.mxu0 0
        %870 = vmatprep.subr.bf16.mxu0 0
        %871 = vmatpush2.bf16.msra.mxu0 0
        %872 = vmatprep.mubr.bf16.mxu0 0
        %873 = vmatmul.mubr.bf16.gmra.mxu0 %v682
        %v874 = vpop.f32.mrf.mxu0
        %v875 = vadd.f32 0.0, %v874
        %v876 = vpop.f32.mrf.mxu0
        %v877 = vpop.f32.mrf.mxu0
        %v878 = vpop.f32.mrf.mxu0
        %879 = vdwg.mxu0
        %v880 = vld [vmem:[%s6] sm:$0xf]
        %v881 = vld [vmem:[%s6 + $0x4] sm:$0xf]
        %v882 = vld [vmem:[%s6 + $0x8] sm:$0xf]
        %v883 = vld [vmem:[%s6 + $0xc] sm:$0xf]
        %v884 = vld [vmem:[%s6 + $0x10] sm:$0xf]
        %v885 = vld [vmem:[%s6 + $0x14] sm:$0xf]
        %v886 = vld [vmem:[%s6 + $0x18] sm:$0xf]
        %v887 = vld [vmem:[%s6 + $0x1c] sm:$0xf]
        %v888 = vld [vmem:[%s6 + $0x20] sm:$0xf]
        %v889 = vld [vmem:[%s6 + $0x24] sm:$0xf]
        %v890 = vld [vmem:[%s6 + $0x28] sm:$0xf]
        %v891 = vld [vmem:[%s6 + $0x2c] sm:$0xf]
        %v892 = vld [vmem:[%s6 + $0x30] sm:$0xf]
        %v893 = vld [vmem:[%s6 + $0x34] sm:$0xf]
        %v894 = vld [vmem:[%s6 + $0x38] sm:$0xf]
        %v895 = vld [vmem:[%s6 + $0x3c] sm:$0xf]
        %v900 = vunpack.c.l.b16 %v880
        %v901 = vunpack.c.l.b16 %v881
        %v902 = vunpack.c.l.b16 %v882
        %v903 = vunpack.c.l.b16 %v883
        %v904 = vpack.c.b16 %v901, %v900
        %v905 = vpack.c.b16 %v903, %v902
        %v909 = vsel %vm453, %v424, 0
        %911 = vmatprep.subr.bf16.mxu0 0
        %912 = vmatpush1.bf16.msra.mxu0 0
        %913 = vmatprep.subr.bf16.mxu0 0
        %914 = vmatpush1.bf16.msra.mxu0 0
        %915 = vmatprep.subr.bf16.mxu0 0
        %916 = vmatpush1.bf16.msra.mxu0 0
        %917 = vmatprep.subr.bf16.mxu0 0
        %918 = vmatpush1.bf16.msra.mxu0 0
        %919 = vmatprep.subr.bf16.mxu0 0
        %920 = vmatpush1.bf16.msra.mxu0 0
        %921 = vmatprep.subr.bf16.mxu0 0
        %922 = vmatpush1.bf16.msra.mxu0 0
        %923 = vmatprep.subr.bf16.mxu0 0
        %924 = vmatpush1.bf16.msra.mxu0 %v905
        %925 = vmatprep.subr.bf16.mxu0 0
        %926 = vmatpush1.bf16.msra.mxu0 %v904
        %927 = vmatprep.subr.bf16.mxu0 0
        %928 = vmatpush2.bf16.msra.mxu0 0
        %929 = vmatprep.subr.bf16.mxu0 0
        %930 = vmatpush2.bf16.msra.mxu0 0
        %931 = vmatprep.subr.bf16.mxu0 0
        %932 = vmatpush2.bf16.msra.mxu0 0
        %933 = vmatprep.subr.bf16.mxu0 0
        %934 = vmatpush2.bf16.msra.mxu0 0
        %935 = vmatprep.subr.bf16.mxu0 0
        %936 = vmatpush2.bf16.msra.mxu0 0
        %937 = vmatprep.subr.bf16.mxu0 0
        %938 = vmatpush2.bf16.msra.mxu0 0
        %939 = vmatprep.subr.bf16.mxu0 0
        %940 = vmatpush2.bf16.msra.mxu0 0
        %941 = vmatprep.subr.bf16.mxu0 0
        %942 = vmatpush2.bf16.msra.mxu0 0
        %943 = vmatprep.mubr.bf16.mxu0 0
        %944 = vmatmul.mubr.bf16.gmra.mxu0 %v909
        %v945 = vpop.f32.mrf.mxu0
        %v946 = vadd.f32 0.0, %v945
        %v947 = vpop.f32.mrf.mxu0
        %v948 = vpop.f32.mrf.mxu0
        %v949 = vpop.f32.mrf.mxu0
        %950 = vdwg.mxu0
        %v955 = vunpack.c.l.b16 %v884
        %v956 = vunpack.c.l.b16 %v885
        %v957 = vunpack.c.l.b16 %v886
        %v958 = vunpack.c.l.b16 %v887
        %v959 = vpack.c.b16 %v956, %v955
        %v960 = vpack.c.b16 %v958, %v957
        %963 = vmatprep.subr.bf16.mxu0 0
        %964 = vmatpush1.bf16.msra.mxu0 0
        %965 = vmatprep.subr.bf16.mxu0 0
        %966 = vmatpush1.bf16.msra.mxu0 0
        %967 = vmatprep.subr.bf16.mxu0 0
        %968 = vmatpush1.bf16.msra.mxu0 0
        %969 = vmatprep.subr.bf16.mxu0 0
        %970 = vmatpush1.bf16.msra.mxu0 0
        %971 = vmatprep.subr.bf16.mxu0 0
        %972 = vmatpush1.bf16.msra.mxu0 0
        %973 = vmatprep.subr.bf16.mxu0 0
        %974 = vmatpush1.bf16.msra.mxu0 0
        %975 = vmatprep.subr.bf16.mxu0 0
        %976 = vmatpush1.bf16.msra.mxu0 %v960
        %977 = vmatprep.subr.bf16.mxu0 0
        %978 = vmatpush1.bf16.msra.mxu0 %v959
        %979 = vmatprep.subr.bf16.mxu0 0
        %980 = vmatpush2.bf16.msra.mxu0 0
        %981 = vmatprep.subr.bf16.mxu0 0
        %982 = vmatpush2.bf16.msra.mxu0 0
        %983 = vmatprep.subr.bf16.mxu0 0
        %984 = vmatpush2.bf16.msra.mxu0 0
        %985 = vmatprep.subr.bf16.mxu0 0
        %986 = vmatpush2.bf16.msra.mxu0 0
        %987 = vmatprep.subr.bf16.mxu0 0
        %988 = vmatpush2.bf16.msra.mxu0 0
        %989 = vmatprep.subr.bf16.mxu0 0
        %990 = vmatpush2.bf16.msra.mxu0 0
        %991 = vmatprep.subr.bf16.mxu0 0
        %992 = vmatpush2.bf16.msra.mxu0 0
        %993 = vmatprep.subr.bf16.mxu0 0
        %994 = vmatpush2.bf16.msra.mxu0 0
        %995 = vmatprep.mubr.bf16.mxu0 0
        %996 = vmatmul.mubr.bf16.gmra.mxu0 %v909
        %v997 = vpop.f32.mrf.mxu0
        %v998 = vadd.f32 0.0, %v997
        %v999 = vpop.f32.mrf.mxu0
        %v1000 = vpop.f32.mrf.mxu0
        %v1001 = vpop.f32.mrf.mxu0
        %1002 = vdwg.mxu0
        %v1007 = vunpack.c.l.b16 %v888
        %v1008 = vunpack.c.l.b16 %v889
        %v1009 = vunpack.c.l.b16 %v890
        %v1010 = vunpack.c.l.b16 %v891
        %v1011 = vpack.c.b16 %v1008, %v1007
        %v1012 = vpack.c.b16 %v1010, %v1009
        %1015 = vmatprep.subr.bf16.mxu0 0
        %1016 = vmatpush1.bf16.msra.mxu0 0
        %1017 = vmatprep.subr.bf16.mxu0 0
        %1018 = vmatpush1.bf16.msra.mxu0 0
        %1019 = vmatprep.subr.bf16.mxu0 0
        %1020 = vmatpush1.bf16.msra.mxu0 0
        %1021 = vmatprep.subr.bf16.mxu0 0
        %1022 = vmatpush1.bf16.msra.mxu0 0
        %1023 = vmatprep.subr.bf16.mxu0 0
        %1024 = vmatpush1.bf16.msra.mxu0 0
        %1025 = vmatprep.subr.bf16.mxu0 0
        %1026 = vmatpush1.bf16.msra.mxu0 0
        %1027 = vmatprep.subr.bf16.mxu0 0
        %1028 = vmatpush1.bf16.msra.mxu0 %v1012
        %1029 = vmatprep.subr.bf16.mxu0 0
        %1030 = vmatpush1.bf16.msra.mxu0 %v1011
        %1031 = vmatprep.subr.bf16.mxu0 0
        %1032 = vmatpush2.bf16.msra.mxu0 0
        %1033 = vmatprep.subr.bf16.mxu0 0
        %1034 = vmatpush2.bf16.msra.mxu0 0
        %1035 = vmatprep.subr.bf16.mxu0 0
        %1036 = vmatpush2.bf16.msra.mxu0 0
        %1037 = vmatprep.subr.bf16.mxu0 0
        %1038 = vmatpush2.bf16.msra.mxu0 0
        %1039 = vmatprep.subr.bf16.mxu0 0
        %1040 = vmatpush2.bf16.msra.mxu0 0
        %1041 = vmatprep.subr.bf16.mxu0 0
        %1042 = vmatpush2.bf16.msra.mxu0 0
        %1043 = vmatprep.subr.bf16.mxu0 0
        %1044 = vmatpush2.bf16.msra.mxu0 0
        %1045 = vmatprep.subr.bf16.mxu0 0
        %1046 = vmatpush2.bf16.msra.mxu0 0
        %1047 = vmatprep.mubr.bf16.mxu0 0
        %1048 = vmatmul.mubr.bf16.gmra.mxu0 %v909
        %v1049 = vpop.f32.mrf.mxu0
        %v1050 = vadd.f32 0.0, %v1049
        %v1051 = vpop.f32.mrf.mxu0
        %v1052 = vpop.f32.mrf.mxu0
        %v1053 = vpop.f32.mrf.mxu0
        %1054 = vdwg.mxu0
        %v1059 = vunpack.c.l.b16 %v892
        %v1060 = vunpack.c.l.b16 %v893
        %v1061 = vunpack.c.l.b16 %v894
        %v1062 = vunpack.c.l.b16 %v895
        %v1063 = vpack.c.b16 %v1060, %v1059
        %v1064 = vpack.c.b16 %v1062, %v1061
        %1067 = vmatprep.subr.bf16.mxu0 0
        %1068 = vmatpush1.bf16.msra.mxu0 0
        %1069 = vmatprep.subr.bf16.mxu0 0
        %1070 = vmatpush1.bf16.msra.mxu0 0
        %1071 = vmatprep.subr.bf16.mxu0 0
        %1072 = vmatpush1.bf16.msra.mxu0 0
        %1073 = vmatprep.subr.bf16.mxu0 0
        %1074 = vmatpush1.bf16.msra.mxu0 0
        %1075 = vmatprep.subr.bf16.mxu0 0
        %1076 = vmatpush1.bf16.msra.mxu0 0
        %1077 = vmatprep.subr.bf16.mxu0 0
        %1078 = vmatpush1.bf16.msra.mxu0 0
        %1079 = vmatprep.subr.bf16.mxu0 0
        %1080 = vmatpush1.bf16.msra.mxu0 %v1064
        %1081 = vmatprep.subr.bf16.mxu0 0
        %1082 = vmatpush1.bf16.msra.mxu0 %v1063
        %1083 = vmatprep.subr.bf16.mxu0 0
        %1084 = vmatpush2.bf16.msra.mxu0 0
        %1085 = vmatprep.subr.bf16.mxu0 0
        %1086 = vmatpush2.bf16.msra.mxu0 0
        %1087 = vmatprep.subr.bf16.mxu0 0
        %1088 = vmatpush2.bf16.msra.mxu0 0
        %1089 = vmatprep.subr.bf16.mxu0 0
        %1090 = vmatpush2.bf16.msra.mxu0 0
        %1091 = vmatprep.subr.bf16.mxu0 0
        %1092 = vmatpush2.bf16.msra.mxu0 0
        %1093 = vmatprep.subr.bf16.mxu0 0
        %1094 = vmatpush2.bf16.msra.mxu0 0
        %1095 = vmatprep.subr.bf16.mxu0 0
        %1096 = vmatpush2.bf16.msra.mxu0 0
        %1097 = vmatprep.subr.bf16.mxu0 0
        %1098 = vmatpush2.bf16.msra.mxu0 0
        %1099 = vmatprep.mubr.bf16.mxu0 0
        %1100 = vmatmul.mubr.bf16.gmra.mxu0 %v909
        %v1101 = vpop.f32.mrf.mxu0
        %v1102 = vadd.f32 0.0, %v1101
        %v1103 = vpop.f32.mrf.mxu0
        %v1104 = vpop.f32.mrf.mxu0
        %v1105 = vpop.f32.mrf.mxu0
        %1106 = vdwg.mxu0
        %v1107 = vld [vmem:[%s416] sm:$0x3]
        %v1108 = vunpack.c.0.s8 %v1107
        %v1109 = vcvt.s32.f32 %v1108
        %v1110 = vsub.f32 %v1109, 1.0
        %v1111 = vmul.f32 %v1110, 1e+09
        %v1112 = vpack.c.bf16 %v492, %v492
        %v1113 = vpack.c.bf16 %v544, %v544
        %v1114 = vpack.c.bf16 %v596, %v596
        %v1115 = vpack.c.bf16 %v648, %v648
        %v1116 = vpack.c.bf16 %v719, %v719
        %v1117 = vpack.c.bf16 %v771, %v771
        %v1118 = vpack.c.bf16 %v823, %v823
        %v1119 = vpack.c.bf16 %v875, %v875
        %vm1120 = vcmask 64512
        %v1122 = vsel %vm1120, %v1112, 0
        %v1125 = vsel %vm1120, %v1116, 0
        %1127 = vmatprep.subr.bf16.mxu0 0
        %1128 = vmatpush1.bf16.xpose.msra.mxu0 0
        %1129 = vmatprep.subr.bf16.mxu0 0
        %1130 = vmatpush1.bf16.xpose.msra.mxu0 0
        %1131 = vmatprep.subr.bf16.mxu0 0
        %1132 = vmatpush1.bf16.xpose.msra.mxu0 0
        %1133 = vmatprep.subr.bf16.mxu0 0
        %1134 = vmatpush1.bf16.xpose.msra.mxu0 0
        %1135 = vmatprep.subr.bf16.mxu0 0
        %1136 = vmatpush1.bf16.xpose.msra.mxu0 0
        %1137 = vmatprep.subr.bf16.mxu0 0
        %1138 = vmatpush1.bf16.xpose.msra.mxu0 0
        %1139 = vmatprep.subr.bf16.mxu0 0
        %1140 = vmatpush1.bf16.xpose.msra.mxu0 0
        %1141 = vmatprep.subr.bf16.mxu0 0
        %1142 = vmatpush1.bf16.xpose.msra.mxu0 %v1125
        %1143 = vmatprep.subr.bf16.mxu0 0
        %1144 = vmatpush2.bf16.xpose.msra.mxu0 0
        %1145 = vmatprep.subr.bf16.mxu0 0
        %1146 = vmatpush2.bf16.xpose.msra.mxu0 0
        %1147 = vmatprep.subr.bf16.mxu0 0
        %1148 = vmatpush2.bf16.xpose.msra.mxu0 0
        %1149 = vmatprep.subr.bf16.mxu0 0
        %1150 = vmatpush2.bf16.xpose.msra.mxu0 0
        %1151 = vmatprep.subr.bf16.mxu0 0
        %1152 = vmatpush2.bf16.xpose.msra.mxu0 0
        %1153 = vmatprep.subr.bf16.mxu0 0
        %1154 = vmatpush2.bf16.xpose.msra.mxu0 0
        %1155 = vmatprep.subr.bf16.mxu0 0
        %1156 = vmatpush2.bf16.xpose.msra.mxu0 0
        %1157 = vmatprep.subr.bf16.mxu0 0
        %1158 = vmatpush2.bf16.xpose.msra.mxu0 0
        %1159 = vmatprep.mubr.bf16.mxu0 0
        %1160 = vmatmul.mubr.bf16.gmra.mxu0 %v1122
        %v1161 = vpop.f32.mrf.mxu0
        %v1162 = vadd.f32 %v1111, %v1161
        %v1163 = vpop.f32.mrf.mxu0
        %v1164 = vpop.f32.mrf.mxu0
        %v1165 = vpop.f32.mrf.mxu0
        %1166 = vdwg.mxu0
        %v1168 = vsel %vm1120, %v1113, 0
        %v1171 = vsel %vm1120, %v1117, 0
        %1173 = vmatprep.subr.bf16.mxu0 0
        %1174 = vmatpush1.bf16.xpose.msra.mxu0 0
        %1175 = vmatprep.subr.bf16.mxu0 0
        %1176 = vmatpush1.bf16.xpose.msra.mxu0 0
        %1177 = vmatprep.subr.bf16.mxu0 0
        %1178 = vmatpush1.bf16.xpose.msra.mxu0 0
        %1179 = vmatprep.subr.bf16.mxu0 0
        %1180 = vmatpush1.bf16.xpose.msra.mxu0 0
        %1181 = vmatprep.subr.bf16.mxu0 0
        %1182 = vmatpush1.bf16.xpose.msra.mxu0 0
        %1183 = vmatprep.subr.bf16.mxu0 0
        %1184 = vmatpush1.bf16.xpose.msra.mxu0 0
        %1185 = vmatprep.subr.bf16.mxu0 0
        %1186 = vmatpush1.bf16.xpose.msra.mxu0 0
        %1187 = vmatprep.subr.bf16.mxu0 0
        %1188 = vmatpush1.bf16.xpose.msra.mxu0 %v1171
        %1189 = vmatprep.subr.bf16.mxu0 0
        %1190 = vmatpush2.bf16.xpose.msra.mxu0 0
        %1191 = vmatprep.subr.bf16.mxu0 0
        %1192 = vmatpush2.bf16.xpose.msra.mxu0 0
        %1193 = vmatprep.subr.bf16.mxu0 0
        %1194 = vmatpush2.bf16.xpose.msra.mxu0 0
        %1195 = vmatprep.subr.bf16.mxu0 0
        %1196 = vmatpush2.bf16.xpose.msra.mxu0 0
        %1197 = vmatprep.subr.bf16.mxu0 0
        %1198 = vmatpush2.bf16.xpose.msra.mxu0 0
        %1199 = vmatprep.subr.bf16.mxu0 0
        %1200 = vmatpush2.bf16.xpose.msra.mxu0 0
        %1201 = vmatprep.subr.bf16.mxu0 0
        %1202 = vmatpush2.bf16.xpose.msra.mxu0 0
        %1203 = vmatprep.subr.bf16.mxu0 0
        %1204 = vmatpush2.bf16.xpose.msra.mxu0 0
        %1205 = vmatprep.mubr.bf16.mxu0 0
        %1206 = vmatmul.mubr.bf16.gmra.mxu0 %v1168
        %v1207 = vpop.f32.mrf.mxu0
        %v1208 = vadd.f32 %v1111, %v1207
        %v1209 = vpop.f32.mrf.mxu0
        %v1210 = vpop.f32.mrf.mxu0
        %v1211 = vpop.f32.mrf.mxu0
        %1212 = vdwg.mxu0
        %v1214 = vsel %vm1120, %v1114, 0
        %v1217 = vsel %vm1120, %v1118, 0
        %1219 = vmatprep.subr.bf16.mxu0 0
        %1220 = vmatpush1.bf16.xpose.msra.mxu0 0
        %1221 = vmatprep.subr.bf16.mxu0 0
        %1222 = vmatpush1.bf16.xpose.msra.mxu0 0
        %1223 = vmatprep.subr.bf16.mxu0 0
        %1224 = vmatpush1.bf16.xpose.msra.mxu0 0
        %1225 = vmatprep.subr.bf16.mxu0 0
        %1226 = vmatpush1.bf16.xpose.msra.mxu0 0
        %1227 = vmatprep.subr.bf16.mxu0 0
        %1228 = vmatpush1.bf16.xpose.msra.mxu0 0
        %1229 = vmatprep.subr.bf16.mxu0 0
        %1230 = vmatpush1.bf16.xpose.msra.mxu0 0
        %1231 = vmatprep.subr.bf16.mxu0 0
        %1232 = vmatpush1.bf16.xpose.msra.mxu0 0
        %1233 = vmatprep.subr.bf16.mxu0 0
        %1234 = vmatpush1.bf16.xpose.msra.mxu0 %v1217
        %1235 = vmatprep.subr.bf16.mxu0 0
        %1236 = vmatpush2.bf16.xpose.msra.mxu0 0
        %1237 = vmatprep.subr.bf16.mxu0 0
        %1238 = vmatpush2.bf16.xpose.msra.mxu0 0
        %1239 = vmatprep.subr.bf16.mxu0 0
        %1240 = vmatpush2.bf16.xpose.msra.mxu0 0
        %1241 = vmatprep.subr.bf16.mxu0 0
        %1242 = vmatpush2.bf16.xpose.msra.mxu0 0
        %1243 = vmatprep.subr.bf16.mxu0 0
        %1244 = vmatpush2.bf16.xpose.msra.mxu0 0
        %1245 = vmatprep.subr.bf16.mxu0 0
        %1246 = vmatpush2.bf16.xpose.msra.mxu0 0
        %1247 = vmatprep.subr.bf16.mxu0 0
        %1248 = vmatpush2.bf16.xpose.msra.mxu0 0
        %1249 = vmatprep.subr.bf16.mxu0 0
        %1250 = vmatpush2.bf16.xpose.msra.mxu0 0
        %1251 = vmatprep.mubr.bf16.mxu0 0
        %1252 = vmatmul.mubr.bf16.gmra.mxu0 %v1214
        %v1253 = vpop.f32.mrf.mxu0
        %v1254 = vadd.f32 %v1111, %v1253
        %v1255 = vpop.f32.mrf.mxu0
        %v1256 = vpop.f32.mrf.mxu0
        %v1257 = vpop.f32.mrf.mxu0
        %1258 = vdwg.mxu0
        %v1260 = vsel %vm1120, %v1115, 0
        %v1263 = vsel %vm1120, %v1119, 0
        %1265 = vmatprep.subr.bf16.mxu0 0
        %1266 = vmatpush1.bf16.xpose.msra.mxu0 0
        %1267 = vmatprep.subr.bf16.mxu0 0
        %1268 = vmatpush1.bf16.xpose.msra.mxu0 0
        %1269 = vmatprep.subr.bf16.mxu0 0
        %1270 = vmatpush1.bf16.xpose.msra.mxu0 0
        %1271 = vmatprep.subr.bf16.mxu0 0
        %1272 = vmatpush1.bf16.xpose.msra.mxu0 0
        %1273 = vmatprep.subr.bf16.mxu0 0
        %1274 = vmatpush1.bf16.xpose.msra.mxu0 0
        %1275 = vmatprep.subr.bf16.mxu0 0
        %1276 = vmatpush1.bf16.xpose.msra.mxu0 0
        %1277 = vmatprep.subr.bf16.mxu0 0
        %1278 = vmatpush1.bf16.xpose.msra.mxu0 0
        %1279 = vmatprep.subr.bf16.mxu0 0
        %1280 = vmatpush1.bf16.xpose.msra.mxu0 %v1263
        %1281 = vmatprep.subr.bf16.mxu0 0
        %1282 = vmatpush2.bf16.xpose.msra.mxu0 0
        %1283 = vmatprep.subr.bf16.mxu0 0
        %1284 = vmatpush2.bf16.xpose.msra.mxu0 0
        %1285 = vmatprep.subr.bf16.mxu0 0
        %1286 = vmatpush2.bf16.xpose.msra.mxu0 0
        %1287 = vmatprep.subr.bf16.mxu0 0
        %1288 = vmatpush2.bf16.xpose.msra.mxu0 0
        %1289 = vmatprep.subr.bf16.mxu0 0
        %1290 = vmatpush2.bf16.xpose.msra.mxu0 0
        %1291 = vmatprep.subr.bf16.mxu0 0
        %1292 = vmatpush2.bf16.xpose.msra.mxu0 0
        %1293 = vmatprep.subr.bf16.mxu0 0
        %1294 = vmatpush2.bf16.xpose.msra.mxu0 0
        %1295 = vmatprep.subr.bf16.mxu0 0
        %1296 = vmatpush2.bf16.xpose.msra.mxu0 0
        %1297 = vmatprep.mubr.bf16.mxu0 0
        %1298 = vmatmul.mubr.bf16.gmra.mxu0 %v1260
        %v1299 = vpop.f32.mrf.mxu0
        %v1300 = vadd.f32 %v1111, %v1299
        %v1301 = vpop.f32.mrf.mxu0
        %v1302 = vpop.f32.mrf.mxu0
        %v1303 = vpop.f32.mrf.mxu0
        %1304 = vdwg.mxu0
        %v1305 = vsel %vm1120, %v1162, -inf
        %1306 = vmax.xlane.f32.xlu0 %v1305
        %v1307 = vpop.xlane.xlu0 %1306
        %v1308 = vsel %vm1120, %v1208, -inf
        %1309 = vmax.xlane.f32.xlu0 %v1308
        %v1310 = vpop.xlane.xlu0 %1309
        %v1311 = vsel %vm1120, %v1254, -inf
        %1312 = vmax.xlane.f32.xlu0 %v1311
        %v1313 = vpop.xlane.xlu0 %1312
        %v1314 = vsel %vm1120, %v1300, -inf
        %1315 = vmax.xlane.f32.xlu0 %v1314
        %v1316 = vpop.xlane.xlu0 %1315
        %v1317 = vsub.f32 %v1162, %v1307
        %v1318 = vsub.f32 %v1208, %v1310
        %v1319 = vsub.f32 %v1254, %v1313
        %v1320 = vsub.f32 %v1300, %v1316
        %v1321 = vmul.f32 %v1317, 1.442695
        %v1322 = vpow.pop %v1321
        %v1323 = vmul.f32 %v1318, 1.442695
        %v1324 = vpow.pop %v1323
        %v1325 = vmul.f32 %v1319, 1.442695
        %v1326 = vpow.pop %v1325
        %v1327 = vmul.f32 %v1320, 1.442695
        %v1328 = vpow.pop %v1327
        %v1329 = vsel %vm1120, %v1322, 0.0
        %1330 = vadd.xlane.f32.xlu0 %v1329
        %v1331 = vpop.xlane.xlu0 %1330
        %v1332 = vsel %vm1120, %v1324, 0.0
        %1333 = vadd.xlane.f32.xlu0 %v1332
        %v1334 = vpop.xlane.xlu0 %1333
        %v1335 = vsel %vm1120, %v1326, 0.0
        %1336 = vadd.xlane.f32.xlu0 %v1335
        %v1337 = vpop.xlane.xlu0 %1336
        %v1338 = vsel %vm1120, %v1328, 0.0
        %1339 = vadd.xlane.f32.xlu0 %v1338
        %v1340 = vpop.xlane.xlu0 %1339
        %v1341 = vrcp.pop %v1331
        %v1342 = vrcp.pop %v1334
        %v1343 = vrcp.pop %v1337
        %v1344 = vrcp.pop %v1340
        %v1345 = vmul.f32 %v1322, %v1341
        %v1346 = vmul.f32 %v1324, %v1342
        %v1347 = vmul.f32 %v1326, %v1343
        %v1348 = vmul.f32 %v1328, %v1344
        %1349 = vst.msk [vmem:[%s400] sm:$0xff] %vm1120, %v1345
        %1350 = vst.msk [vmem:[%s400 + $0x8] sm:$0xff] %vm1120, %v1346
        %1351 = vst.msk [vmem:[%s400 + $0x10] sm:$0xff] %vm1120, %v1347
        %1352 = vst.msk [vmem:[%s400 + $0x18] sm:$0xff] %vm1120, %v1348
        %v1353 = vpack.c.bf16 %v1345, %v1345
        %v1354 = vpack.c.bf16 %v1346, %v1346
        %v1355 = vpack.c.bf16 %v1347, %v1347
        %v1356 = vpack.c.bf16 %v1348, %v1348
        %v1357 = vpack.c.bf16 %v946, %v946
        %v1358 = vpack.c.bf16 %v998, %v998
        %v1359 = vpack.c.bf16 %v1050, %v1050
        %v1360 = vpack.c.bf16 %v1102, %v1102
        %v1362 = vsel %vm1120, %v1353, 0
        %vm1364 = vcmask 1043456
        %v1366 = vsel %vm1364, %v1357, 0
        %1368 = vmatprep.subr.bf16.mxu0 0
        %1369 = vmatpush1.bf16.msra.mxu0 0
        %1370 = vmatprep.subr.bf16.mxu0 0
        %1371 = vmatpush1.bf16.msra.mxu0 0
        %1372 = vmatprep.subr.bf16.mxu0 0
        %1373 = vmatpush1.bf16.msra.mxu0 0
        %1374 = vmatprep.subr.bf16.mxu0 0
        %1375 = vmatpush1.bf16.msra.mxu0 0
        %1376 = vmatprep.subr.bf16.mxu0 0
        %1377 = vmatpush1.bf16.msra.mxu0 0
        %1378 = vmatprep.subr.bf16.mxu0 0
        %1379 = vmatpush1.bf16.msra.mxu0 0
        %1380 = vmatprep.subr.bf16.mxu0 0
        %1381 = vmatpush1.bf16.msra.mxu0 0
        %1382 = vmatprep.subr.bf16.mxu0 0
        %1383 = vmatpush1.bf16.msra.mxu0 %v1366
        %1384 = vmatprep.subr.bf16.mxu0 0
        %1385 = vmatpush2.bf16.msra.mxu0 0
        %1386 = vmatprep.subr.bf16.mxu0 0
        %1387 = vmatpush2.bf16.msra.mxu0 0
        %1388 = vmatprep.subr.bf16.mxu0 0
        %1389 = vmatpush2.bf16.msra.mxu0 0
        %1390 = vmatprep.subr.bf16.mxu0 0
        %1391 = vmatpush2.bf16.msra.mxu0 0
        %1392 = vmatprep.subr.bf16.mxu0 0
        %1393 = vmatpush2.bf16.msra.mxu0 0
        %1394 = vmatprep.subr.bf16.mxu0 0
        %1395 = vmatpush2.bf16.msra.mxu0 0
        %1396 = vmatprep.subr.bf16.mxu0 0
        %1397 = vmatpush2.bf16.msra.mxu0 0
        %1398 = vmatprep.subr.bf16.mxu0 0
        %1399 = vmatpush2.bf16.msra.mxu0 0
        %1400 = vmatprep.mubr.bf16.mxu0 0
        %1401 = vmatmul.mubr.bf16.gmra.mxu0 %v1362
        %v1402 = vpop.f32.mrf.mxu0
        %v1403 = vadd.f32 0.0, %v1402
        %v1404 = vpop.f32.mrf.mxu0
        %v1405 = vpop.f32.mrf.mxu0
        %v1406 = vpop.f32.mrf.mxu0
        %1407 = vdwg.mxu0
        %v1409 = vsel %vm1120, %v1354, 0
        %v1412 = vsel %vm1364, %v1358, 0
        %1414 = vmatprep.subr.bf16.mxu0 0
        %1415 = vmatpush1.bf16.msra.mxu0 0
        %1416 = vmatprep.subr.bf16.mxu0 0
        %1417 = vmatpush1.bf16.msra.mxu0 0
        %1418 = vmatprep.subr.bf16.mxu0 0
        %1419 = vmatpush1.bf16.msra.mxu0 0
        %1420 = vmatprep.subr.bf16.mxu0 0
        %1421 = vmatpush1.bf16.msra.mxu0 0
        %1422 = vmatprep.subr.bf16.mxu0 0
        %1423 = vmatpush1.bf16.msra.mxu0 0
        %1424 = vmatprep.subr.bf16.mxu0 0
        %1425 = vmatpush1.bf16.msra.mxu0 0
        %1426 = vmatprep.subr.bf16.mxu0 0
        %1427 = vmatpush1.bf16.msra.mxu0 0
        %1428 = vmatprep.subr.bf16.mxu0 0
        %1429 = vmatpush1.bf16.msra.mxu0 %v1412
        %1430 = vmatprep.subr.bf16.mxu0 0
        %1431 = vmatpush2.bf16.msra.mxu0 0
        %1432 = vmatprep.subr.bf16.mxu0 0
        %1433 = vmatpush2.bf16.msra.mxu0 0
        %1434 = vmatprep.subr.bf16.mxu0 0
        %1435 = vmatpush2.bf16.msra.mxu0 0
        %1436 = vmatprep.subr.bf16.mxu0 0
        %1437 = vmatpush2.bf16.msra.mxu0 0
        %1438 = vmatprep.subr.bf16.mxu0 0
        %1439 = vmatpush2.bf16.msra.mxu0 0
        %1440 = vmatprep.subr.bf16.mxu0 0
        %1441 = vmatpush2.bf16.msra.mxu0 0
        %1442 = vmatprep.subr.bf16.mxu0 0
        %1443 = vmatpush2.bf16.msra.mxu0 0
        %1444 = vmatprep.subr.bf16.mxu0 0
        %1445 = vmatpush2.bf16.msra.mxu0 0
        %1446 = vmatprep.mubr.bf16.mxu0 0
        %1447 = vmatmul.mubr.bf16.gmra.mxu0 %v1409
        %v1448 = vpop.f32.mrf.mxu0
        %v1449 = vadd.f32 0.0, %v1448
        %v1450 = vpop.f32.mrf.mxu0
        %v1451 = vpop.f32.mrf.mxu0
        %v1452 = vpop.f32.mrf.mxu0
        %1453 = vdwg.mxu0
        %v1455 = vsel %vm1120, %v1355, 0
        %v1458 = vsel %vm1364, %v1359, 0
        %1460 = vmatprep.subr.bf16.mxu0 0
        %1461 = vmatpush1.bf16.msra.mxu0 0
        %1462 = vmatprep.subr.bf16.mxu0 0
        %1463 = vmatpush1.bf16.msra.mxu0 0
        %1464 = vmatprep.subr.bf16.mxu0 0
        %1465 = vmatpush1.bf16.msra.mxu0 0
        %1466 = vmatprep.subr.bf16.mxu0 0
        %1467 = vmatpush1.bf16.msra.mxu0 0
        %1468 = vmatprep.subr.bf16.mxu0 0
        %1469 = vmatpush1.bf16.msra.mxu0 0
        %1470 = vmatprep.subr.bf16.mxu0 0
        %1471 = vmatpush1.bf16.msra.mxu0 0
        %1472 = vmatprep.subr.bf16.mxu0 0
        %1473 = vmatpush1.bf16.msra.mxu0 0
        %1474 = vmatprep.subr.bf16.mxu0 0
        %1475 = vmatpush1.bf16.msra.mxu0 %v1458
        %1476 = vmatprep.subr.bf16.mxu0 0
        %1477 = vmatpush2.bf16.msra.mxu0 0
        %1478 = vmatprep.subr.bf16.mxu0 0
        %1479 = vmatpush2.bf16.msra.mxu0 0
        %1480 = vmatprep.subr.bf16.mxu0 0
        %1481 = vmatpush2.bf16.msra.mxu0 0
        %1482 = vmatprep.subr.bf16.mxu0 0
        %1483 = vmatpush2.bf16.msra.mxu0 0
        %1484 = vmatprep.subr.bf16.mxu0 0
        %1485 = vmatpush2.bf16.msra.mxu0 0
        %1486 = vmatprep.subr.bf16.mxu0 0
        %1487 = vmatpush2.bf16.msra.mxu0 0
        %1488 = vmatprep.subr.bf16.mxu0 0
        %1489 = vmatpush2.bf16.msra.mxu0 0
        %1490 = vmatprep.subr.bf16.mxu0 0
        %1491 = vmatpush2.bf16.msra.mxu0 0
        %1492 = vmatprep.mubr.bf16.mxu0 0
        %1493 = vmatmul.mubr.bf16.gmra.mxu0 %v1455
        %v1494 = vpop.f32.mrf.mxu0
        %v1495 = vadd.f32 0.0, %v1494
        %v1496 = vpop.f32.mrf.mxu0
        %v1497 = vpop.f32.mrf.mxu0
        %v1498 = vpop.f32.mrf.mxu0
        %1499 = vdwg.mxu0
        %v1501 = vsel %vm1120, %v1356, 0
        %v1504 = vsel %vm1364, %v1360, 0
        %1506 = vmatprep.subr.bf16.mxu0 0
        %1507 = vmatpush1.bf16.msra.mxu0 0
        %1508 = vmatprep.subr.bf16.mxu0 0
        %1509 = vmatpush1.bf16.msra.mxu0 0
        %1510 = vmatprep.subr.bf16.mxu0 0
        %1511 = vmatpush1.bf16.msra.mxu0 0
        %1512 = vmatprep.subr.bf16.mxu0 0
        %1513 = vmatpush1.bf16.msra.mxu0 0
        %1514 = vmatprep.subr.bf16.mxu0 0
        %1515 = vmatpush1.bf16.msra.mxu0 0
        %1516 = vmatprep.subr.bf16.mxu0 0
        %1517 = vmatpush1.bf16.msra.mxu0 0
        %1518 = vmatprep.subr.bf16.mxu0 0
        %1519 = vmatpush1.bf16.msra.mxu0 0
        %1520 = vmatprep.subr.bf16.mxu0 0
        %1521 = vmatpush1.bf16.msra.mxu0 %v1504
        %1522 = vmatprep.subr.bf16.mxu0 0
        %1523 = vmatpush2.bf16.msra.mxu0 0
        %1524 = vmatprep.subr.bf16.mxu0 0
        %1525 = vmatpush2.bf16.msra.mxu0 0
        %1526 = vmatprep.subr.bf16.mxu0 0
        %1527 = vmatpush2.bf16.msra.mxu0 0
        %1528 = vmatprep.subr.bf16.mxu0 0
        %1529 = vmatpush2.bf16.msra.mxu0 0
        %1530 = vmatprep.subr.bf16.mxu0 0
        %1531 = vmatpush2.bf16.msra.mxu0 0
        %1532 = vmatprep.subr.bf16.mxu0 0
        %1533 = vmatpush2.bf16.msra.mxu0 0
        %1534 = vmatprep.subr.bf16.mxu0 0
        %1535 = vmatpush2.bf16.msra.mxu0 0
        %1536 = vmatprep.subr.bf16.mxu0 0
        %1537 = vmatpush2.bf16.msra.mxu0 0
        %1538 = vmatprep.mubr.bf16.mxu0 0
        %1539 = vmatmul.mubr.bf16.gmra.mxu0 %v1501
        %v1540 = vpop.f32.mrf.mxu0
        %v1541 = vadd.f32 0.0, %v1540
        %v1542 = vpop.f32.mrf.mxu0
        %v1543 = vpop.f32.mrf.mxu0
        %v1544 = vpop.f32.mrf.mxu0
        %1545 = vdwg.mxu0
        %v1546 = vpack.c.bf16 %v1403, %v1403
        %v1547 = vpack.c.bf16 %v1449, %v1449
        %v1548 = vpack.c.bf16 %v1495, %v1495
        %v1549 = vpack.c.bf16 %v1541, %v1541
        %v1550 = vld [vmem:[%s7] sm:$0xf]
        %v1551 = vld [vmem:[%s7 + $0x4] sm:$0xf]
        %v1552 = vld [vmem:[%s7 + $0x8] sm:$0xf]
        %v1553 = vld [vmem:[%s7 + $0xc] sm:$0xf]
        %v1555 = vsel %vm1120, %v1546, 0
        %v1558 = vsel %vm1364, %v1550, 0
        %1560 = vmatprep.subr.bf16.mxu0 0
        %1561 = vmatpush1.bf16.msra.mxu0 0
        %1562 = vmatprep.subr.bf16.mxu0 0
        %1563 = vmatpush1.bf16.msra.mxu0 0
        %1564 = vmatprep.subr.bf16.mxu0 0
        %1565 = vmatpush1.bf16.msra.mxu0 0
        %1566 = vmatprep.subr.bf16.mxu0 0
        %1567 = vmatpush1.bf16.msra.mxu0 0
        %1568 = vmatprep.subr.bf16.mxu0 0
        %1569 = vmatpush1.bf16.msra.mxu0 0
        %1570 = vmatprep.subr.bf16.mxu0 0
        %1571 = vmatpush1.bf16.msra.mxu0 0
        %1572 = vmatprep.subr.bf16.mxu0 0
        %1573 = vmatpush1.bf16.msra.mxu0 0
        %1574 = vmatprep.subr.bf16.mxu0 0
        %1575 = vmatpush1.bf16.msra.mxu0 %v1558
        %1576 = vmatprep.subr.bf16.mxu0 0
        %1577 = vmatpush2.bf16.msra.mxu0 0
        %1578 = vmatprep.subr.bf16.mxu0 0
        %1579 = vmatpush2.bf16.msra.mxu0 0
        %1580 = vmatprep.subr.bf16.mxu0 0
        %1581 = vmatpush2.bf16.msra.mxu0 0
        %1582 = vmatprep.subr.bf16.mxu0 0
        %1583 = vmatpush2.bf16.msra.mxu0 0
        %1584 = vmatprep.subr.bf16.mxu0 0
        %1585 = vmatpush2.bf16.msra.mxu0 0
        %1586 = vmatprep.subr.bf16.mxu0 0
        %1587 = vmatpush2.bf16.msra.mxu0 0
        %1588 = vmatprep.subr.bf16.mxu0 0
        %1589 = vmatpush2.bf16.msra.mxu0 0
        %1590 = vmatprep.subr.bf16.mxu0 0
        %1591 = vmatpush2.bf16.msra.mxu0 0
        %1592 = vmatprep.mubr.bf16.mxu0 0
        %1593 = vmatmul.mubr.bf16.gmra.mxu0 %v1555
        %v1594 = vpop.f32.mrf.mxu0
        %v1595 = vadd.f32 0.0, %v1594
        %v1596 = vpop.f32.mrf.mxu0
        %v1597 = vpop.f32.mrf.mxu0
        %v1598 = vpop.f32.mrf.mxu0
        %1599 = vdwg.mxu0
        %v1601 = vsel %vm1120, %v1547, 0
        %v1604 = vsel %vm1364, %v1551, 0
        %1606 = vmatprep.subr.bf16.mxu0 0
        %1607 = vmatpush1.bf16.msra.mxu0 0
        %1608 = vmatprep.subr.bf16.mxu0 0
        %1609 = vmatpush1.bf16.msra.mxu0 0
        %1610 = vmatprep.subr.bf16.mxu0 0
        %1611 = vmatpush1.bf16.msra.mxu0 0
        %1612 = vmatprep.subr.bf16.mxu0 0
        %1613 = vmatpush1.bf16.msra.mxu0 0
        %1614 = vmatprep.subr.bf16.mxu0 0
        %1615 = vmatpush1.bf16.msra.mxu0 0
        %1616 = vmatprep.subr.bf16.mxu0 0
        %1617 = vmatpush1.bf16.msra.mxu0 0
        %1618 = vmatprep.subr.bf16.mxu0 0
        %1619 = vmatpush1.bf16.msra.mxu0 0
        %1620 = vmatprep.subr.bf16.mxu0 0
        %1621 = vmatpush1.bf16.msra.mxu0 %v1604
        %1622 = vmatprep.subr.bf16.mxu0 0
        %1623 = vmatpush2.bf16.msra.mxu0 0
        %1624 = vmatprep.subr.bf16.mxu0 0
        %1625 = vmatpush2.bf16.msra.mxu0 0
        %1626 = vmatprep.subr.bf16.mxu0 0
        %1627 = vmatpush2.bf16.msra.mxu0 0
        %1628 = vmatprep.subr.bf16.mxu0 0
        %1629 = vmatpush2.bf16.msra.mxu0 0
        %1630 = vmatprep.subr.bf16.mxu0 0
        %1631 = vmatpush2.bf16.msra.mxu0 0
        %1632 = vmatprep.subr.bf16.mxu0 0
        %1633 = vmatpush2.bf16.msra.mxu0 0
        %1634 = vmatprep.subr.bf16.mxu0 0
        %1635 = vmatpush2.bf16.msra.mxu0 0
        %1636 = vmatprep.subr.bf16.mxu0 0
        %1637 = vmatpush2.bf16.msra.mxu0 0
        %1638 = vmatprep.mubr.bf16.mxu0 0
        %1639 = vmatmul.mubr.bf16.gmra.mxu0 %v1601
        %v1640 = vpop.f32.mrf.mxu0
        %v1641 = vadd.f32 0.0, %v1640
        %v1642 = vpop.f32.mrf.mxu0
        %v1643 = vpop.f32.mrf.mxu0
        %v1644 = vpop.f32.mrf.mxu0
        %1645 = vdwg.mxu0
        %v1647 = vsel %vm1120, %v1548, 0
        %v1650 = vsel %vm1364, %v1552, 0
        %1652 = vmatprep.subr.bf16.mxu0 0
        %1653 = vmatpush1.bf16.msra.mxu0 0
        %1654 = vmatprep.subr.bf16.mxu0 0
        %1655 = vmatpush1.bf16.msra.mxu0 0
        %1656 = vmatprep.subr.bf16.mxu0 0
        %1657 = vmatpush1.bf16.msra.mxu0 0
        %1658 = vmatprep.subr.bf16.mxu0 0
        %1659 = vmatpush1.bf16.msra.mxu0 0
        %1660 = vmatprep.subr.bf16.mxu0 0
        %1661 = vmatpush1.bf16.msra.mxu0 0
        %1662 = vmatprep.subr.bf16.mxu0 0
        %1663 = vmatpush1.bf16.msra.mxu0 0
        %1664 = vmatprep.subr.bf16.mxu0 0
        %1665 = vmatpush1.bf16.msra.mxu0 0
        %1666 = vmatprep.subr.bf16.mxu0 0
        %1667 = vmatpush1.bf16.msra.mxu0 %v1650
        %1668 = vmatprep.subr.bf16.mxu0 0
        %1669 = vmatpush2.bf16.msra.mxu0 0
        %1670 = vmatprep.subr.bf16.mxu0 0
        %1671 = vmatpush2.bf16.msra.mxu0 0
        %1672 = vmatprep.subr.bf16.mxu0 0
        %1673 = vmatpush2.bf16.msra.mxu0 0
        %1674 = vmatprep.subr.bf16.mxu0 0
        %1675 = vmatpush2.bf16.msra.mxu0 0
        %1676 = vmatprep.subr.bf16.mxu0 0
        %1677 = vmatpush2.bf16.msra.mxu0 0
        %1678 = vmatprep.subr.bf16.mxu0 0
        %1679 = vmatpush2.bf16.msra.mxu0 0
        %1680 = vmatprep.subr.bf16.mxu0 0
        %1681 = vmatpush2.bf16.msra.mxu0 0
        %1682 = vmatprep.subr.bf16.mxu0 0
        %1683 = vmatpush2.bf16.msra.mxu0 0
        %1684 = vmatprep.mubr.bf16.mxu0 0
        %1685 = vmatmul.mubr.bf16.gmra.mxu0 %v1647
        %v1686 = vpop.f32.mrf.mxu0
        %v1687 = vadd.f32 0.0, %v1686
        %v1688 = vpop.f32.mrf.mxu0
        %v1689 = vpop.f32.mrf.mxu0
        %v1690 = vpop.f32.mrf.mxu0
        %1691 = vdwg.mxu0
        %v1693 = vsel %vm1120, %v1549, 0
        %v1696 = vsel %vm1364, %v1553, 0
        %1698 = vmatprep.subr.bf16.mxu0 0
        %1699 = vmatpush1.bf16.msra.mxu0 0
        %1700 = vmatprep.subr.bf16.mxu0 0
        %1701 = vmatpush1.bf16.msra.mxu0 0
        %1702 = vmatprep.subr.bf16.mxu0 0
        %1703 = vmatpush1.bf16.msra.mxu0 0
        %1704 = vmatprep.subr.bf16.mxu0 0
        %1705 = vmatpush1.bf16.msra.mxu0 0
        %1706 = vmatprep.subr.bf16.mxu0 0
        %1707 = vmatpush1.bf16.msra.mxu0 0
        %1708 = vmatprep.subr.bf16.mxu0 0
        %1709 = vmatpush1.bf16.msra.mxu0 0
        %1710 = vmatprep.subr.bf16.mxu0 0
        %1711 = vmatpush1.bf16.msra.mxu0 0
        %1712 = vmatprep.subr.bf16.mxu0 0
        %1713 = vmatpush1.bf16.msra.mxu0 %v1696
        %1714 = vmatprep.subr.bf16.mxu0 0
        %1715 = vmatpush2.bf16.msra.mxu0 0
        %1716 = vmatprep.subr.bf16.mxu0 0
        %1717 = vmatpush2.bf16.msra.mxu0 0
        %1718 = vmatprep.subr.bf16.mxu0 0
        %1719 = vmatpush2.bf16.msra.mxu0 0
        %1720 = vmatprep.subr.bf16.mxu0 0
        %1721 = vmatpush2.bf16.msra.mxu0 0
        %1722 = vmatprep.subr.bf16.mxu0 0
        %1723 = vmatpush2.bf16.msra.mxu0 0
        %1724 = vmatprep.subr.bf16.mxu0 0
        %1725 = vmatpush2.bf16.msra.mxu0 0
        %1726 = vmatprep.subr.bf16.mxu0 0
        %1727 = vmatpush2.bf16.msra.mxu0 0
        %1728 = vmatprep.subr.bf16.mxu0 0
        %1729 = vmatpush2.bf16.msra.mxu0 0
        %1730 = vmatprep.mubr.bf16.mxu0 0
        %1731 = vmatmul.mubr.bf16.gmra.mxu0 %v1693
        %v1732 = vpop.f32.mrf.mxu0
        %v1733 = vadd.f32 0.0, %v1732
        %v1734 = vpop.f32.mrf.mxu0
        %v1735 = vpop.f32.mrf.mxu0
        %v1736 = vpop.f32.mrf.mxu0
        %1737 = vdwg.mxu0
        %v1738 = vsel %vm453, %v1595, 0.0
        %v1739 = vsel %vm453, %v1641, 0.0
        %v1740 = vadd.f32 %v1738, %v1739
        %v1741 = vsel %vm453, %v1687, 0.0
        %v1742 = vadd.f32 %v1740, %v1741
        %v1743 = vsel %vm453, %v1733, 0.0
        %v1744 = vadd.f32 %v1742, %v1743
        %v1745 = vld [vmem:[%s8] sm:$0x1]
        %v1747 = vlaneseq
        %v1748 = vshrl.u32 %v1747, 7
        %v1749 = vsub.s32 0, %v1748
        %v1750 = vrot.slane %v1745, %v1749
        %v1752 = vadd.f32 %v1744, %v1750
        %1753 = vst.msk [vmem:[%s393] sm:$0xff] %vm453, %v1752
        %s1754 = sand.u32 %s245, 1
        %s1755 = scalar_lea.sflag [#allocation3], %s1754
        %s1756 = sand.u32 %s245, 1
        %s1757 = smul.addr %s1756, 8
        %s1758 = scalar_lea.vmem [#allocation2], %s1757
        %s1759 = sand.u32 %s271, 1
        %s1760 = scalar_lea.sflag [#allocation5], %s1759
        %s1761 = sand.u32 %s271, 1
        %s1762 = smul.addr %s1761, 32
        %s1763 = scalar_lea.vmem [#allocation4], %s1762
        // Predicated region
        $region57: #{tpu_custom_call.1} parent=55 // pred_check
          %p1764 = pneg %p255
        $region58: #{tpu_custom_call.1} parent=55 // pred_check_branch
          %1766 = sbr.rel (%p1764) target = $region60
        $region59: #{tpu_custom_call.1} parent=55 // pred_region
          %s1768 = ssub.s32 128, 128
          %1769 = vsyncadd %s1755, %s1768
          %s1770 = smul.addr %s28, 128
          %s1771 = scalar_lea.hbm %s9, %s1770
          %s1773 = sshll.u32 %s1758, 4
          %s1774 = int_to_ptr.vmem [resolvable:$true] %s1773
          %1776 = dma.vmem_to_hbm [thread:$0]  %s1774, 128, %s1771, %s1755
        $region60: #{tpu_custom_call.1} parent=55 // pred_fallthru
          _
        // Predicated region
        $region61: #{tpu_custom_call.1} parent=55 // pred_check
          %p1777 = pneg %p281
        $region62: #{tpu_custom_call.1} parent=55 // pred_check_branch
          %1779 = sbr.rel (%p1777) target = $region64
        $region63: #{tpu_custom_call.1} parent=55 // pred_region
          %s1781 = ssub.s32 512, 512
          %1782 = vsyncadd %s1760, %s1781
          %s1783 = smul.addr %s28, 4
          %s1784 = smul.addr %s1783, 128
          %s1785 = scalar_lea.hbm %s10, %s1784
          %s1786 = sshll.u32 %s1763, 4
          %s1787 = int_to_ptr.vmem [resolvable:$true] %s1786
          %1792 = dma.vmem_to_hbm [thread:$0]  %s1787, 512, %s1785, %s1760, 128, 128, 8
        $region64: #{tpu_custom_call.1} parent=55 // pred_fallthru
          _
      $region56: #{tpu_custom_call.1} parent=5 // pred_fallthru
        _
      %p1793 = scmp.le.s32.totalorder 2, %s23
      // Predicated region
      $region65: #{tpu_custom_call.1} parent=5 // pred_check
        %p1794 = pneg %p1793
      $region66: #{tpu_custom_call.1} parent=5 // pred_check_branch
        %1796 = sbr.rel (%p1794) target = $region68
      $region67: #{tpu_custom_call.1} parent=5 // pred_region
        %s1797 = ssub.s32 %s23, 2
        // Predicated region
        $region69: #{tpu_custom_call.1} parent=67 // pred_check
          %p1798 = pneg %p261
        $region70: #{tpu_custom_call.1} parent=67 // pred_check_branch
          %1800 = sbr.rel (%p1798) target = $region72
        $region71: #{tpu_custom_call.1} parent=67 // pred_region
          %s1801 = sand.u32 %s246, 1
          %s1802 = scalar_lea.sflag [#allocation3], %s1801
          %s1803 = sand.u32 %s246, 1
          %s1804 = smul.addr %s1803, 8
          %s1805 = scalar_lea.vmem [#allocation2], %s1804
          %1806 = dma.done %s1802, 128
        $region72: #{tpu_custom_call.1} parent=67 // pred_fallthru
          _
        // Predicated region
        $region73: #{tpu_custom_call.1} parent=67 // pred_check
          %p1807 = pneg %p287
        $region74: #{tpu_custom_call.1} parent=67 // pred_check_branch
          %1809 = sbr.rel (%p1807) target = $region76
        $region75: #{tpu_custom_call.1} parent=67 // pred_region
          %s1810 = sand.u32 %s272, 1
          %s1811 = scalar_lea.sflag [#allocation5], %s1810
          %s1812 = sand.u32 %s272, 1
          %s1813 = smul.addr %s1812, 32
          %s1814 = scalar_lea.vmem [#allocation4], %s1813
          %1815 = dma.done %s1811, 512
        $region76: #{tpu_custom_call.1} parent=67 // pred_fallthru
          _
      $region68: #{tpu_custom_call.1} parent=5 // pred_fallthru
        _
    $region6: #{tpu_custom_call.1} parent=1 // loop_footer
      %s27 = sadd.s32 1, %s23
    $region7: #{tpu_custom_call.1} parent=1 // loop_footer_branch
      %22 = sbr.rel target = $region3
    $region8: #{tpu_custom_call.1} parent=1 // loop_exit
      _
    %1816 = vsyncpa [#allocation3], 1
    %s1817 = scalar_lea.sflag [#allocation3], 1
    %1818 = vsyncpa %s1817, 1
    %1819 = vsyncpa [#allocation5], 1
    %s1820 = scalar_lea.sflag [#allocation5], 1
    %1821 = vsyncpa %s1820, 1

</llo_original>
